<compile_context>
chip_gen: v6e
topology: v6e:2x2x1
jax: 0.10.0
libtpu: 0.0.40
codegen_flags: <defaults>
</compile_context>

<pallas_src>
import functools

import jax
import jax.numpy as jnp
from jax.experimental import pallas as pl
from jax.experimental.pallas import tpu as pltpu


_VMEM_LIMIT = 48 * 1024 * 1024  # leaves headroom under v7x's 64 MiB physical VMEM


# ---------------------------------------------------------------------------
# Pallas kernels
# ---------------------------------------------------------------------------
def _convblock_kernel(p_ref, w_ref, o_ref):
    """Fused 3x3 conv (pad=1) + InstanceNorm2d(affine=False) + ReLU, one image.

    p_ref: (1, 9*Cin, L) bf16  im2col patches, L = H*W on the lane axis
    w_ref: (Cout, 9*Cin) bf16  folded weight slab, K ordered (dy, dx, ci)
    o_ref: (1, Cout, L)  f32   lane-dense output
    """
    # Single MXU matmul with K = 9*Cin (instead of 9 K=Cin matmuls).
    acc = jnp.dot(w_ref[...], p_ref[0], preferred_element_type=jnp.float32)

    # InstanceNorm2d (affine=False), one-pass stats.  The conv bias is omitted
    # on purpose: the mean subtraction cancels it exactly.
    mean = jnp.mean(acc, axis=1, keepdims=True)
    mean_sq = jnp.mean(acc * acc, axis=1, keepdims=True)
    var = mean_sq - mean * mean
    y = (acc - mean) * jax.lax.rsqrt(var + 1e-5)

    # ReLU (Dropout2d is identity in eval / drop_prob=0).
    o_ref[0] = jnp.maximum(y, 0.0).astype(o_ref.dtype)


def _conv1x1_residual_kernel(x_ref, w_ref, b_ref, res_ref, o_ref):
    """Collapsed `conv2` (three chained 1x1 convs folded to one) + residual.

    x_ref:   (1, Cin, L)  f32
    w_ref:   (Cout, Cin)  f32   W3 @ W2 @ W1
    b_ref:   (Cout, 1)    f32   W3 @ (W2 @ b1 + b2) + b3
    res_ref: (1, Cout, L) f32   us_query_input (residual)
    o_ref:   (1, Cout, L) f32
    """
    y = jnp.dot(w_ref[...], x_ref[0], preferred_element_type=jnp.float32)
    y = y + b_ref[...] + res_ref[0]
    o_ref[0] = y.astype(o_ref.dtype)


# ---------------------------------------------------------------------------
# Pallas wrappers
# ---------------------------------------------------------------------------
def _im2col_3x3(x_ncl, H, W):
    """(N, C, H*W) f32 -> (N, 9*C, H*W) bf16 patches.

    The pad / shifted slices / cast fuse into a single XLA producer, so the
    patch slab is laid out once per block (review item: "pre-lay out the patch
    tensor once per block") and shipped to the kernel in bf16.
    """
    N, C, _ = x_ncl.shape
    x = x_ncl.reshape(N, C, H, W)
    xp = jnp.pad(x, ((0, 0), (0, 0), (1, 1), (1, 1)))
    taps = [xp[:, :, dy:dy + H, dx:dx + W]
            for dy in range(3) for dx in range(3)]
    patches = jnp.stack(taps, axis=1)                  # (N, 9, C, H, W)
    return patches.reshape(N, 9 * C, H * W).astype(jnp.bfloat16)


def conv_block(x_ncl, w_slab, H, W):
    """ConvBlock: 3x3 conv + InstanceNorm + ReLU.  x: (N, Cin, H*W) f32."""
    # TODO(synk): for realistic MRI sizes add a spatial grid axis (row tiles
    # with a 1-row halo) and a two-phase InstanceNorm reduction; whole-image
    # blocking is fine at these test shapes.
    N = x_ncl.shape[0]
    Cout, K = w_slab.shape
    L = H * W
    patches = _im2col_3x3(x_ncl, H, W)
    return pl.pallas_call(
        _convblock_kernel,
        out_shape=jax.ShapeDtypeStruct((N, Cout, L), jnp.float32),
        grid=(N,),
        in_specs=[
            pl.BlockSpec((1, K, L), lambda n: (n, 0, 0)),
            pl.BlockSpec((Cout, K), lambda n: (0, 0)),
        ],
        out_specs=pl.BlockSpec((1, Cout, L), lambda n: (n, 0, 0)),
        compiler_params=pltpu.CompilerParams(
            dimension_semantics=("parallel",),
            vmem_limit_bytes=_VMEM_LIMIT),
    )(patches, w_slab)


def conv2_residual(x_ncl, w_comb, b_comb, residual_ncl):
    N, Cin, L = x_ncl.shape
    Cout = w_comb.shape[0]
    return pl.pallas_call(
        _conv1x1_residual_kernel,
        out_shape=jax.ShapeDtypeStruct((N, Cout, L), jnp.float32),
        grid=(N,),
        in_specs=[
            pl.BlockSpec((1, Cin, L), lambda n: (n, 0, 0)),
            pl.BlockSpec((Cout, Cin), lambda n: (0, 0)),
            pl.BlockSpec((Cout, 1), lambda n: (0, 0)),
            pl.BlockSpec((1, Cout, L), lambda n: (n, 0, 0)),
        ],
        out_specs=pl.BlockSpec((1, Cout, L), lambda n: (n, 0, 0)),
        compiler_params=pltpu.CompilerParams(
            dimension_semantics=("parallel",),
            vmem_limit_bytes=_VMEM_LIMIT),
    )(x_ncl, w_comb, b_comb, residual_ncl)


# ---------------------------------------------------------------------------
# Plain-JAX glue (pooling, upsampling, DC)
# ---------------------------------------------------------------------------
def max_pool2(x_ncl, H, W):
    # TODO(synk): could be emitted as a second (pooled) output of the conv
    # kernel epilogue to save one activation HBM round trip.
    N, C, _ = x_ncl.shape
    x = x_ncl.reshape(N, C, H // 2, 2, W // 2, 2)
    return jnp.max(x, axis=(3, 5)).reshape(N, C, (H // 2) * (W // 2))


def upsample2_bilinear(x_ncl, H, W):
    """F.interpolate(scale_factor=2, mode='bilinear', align_corners=False).

    Gather-free closed-form 2x stencil with clamped edges:
      out[2i]   = 0.25*in[i-1] + 0.75*in[i]   (clamp handles i=0 exactly)
      out[2i+1] = 0.75*in[i]   + 0.25*in[i+1] (clamped at the far edge)
    """
    N, C, _ = x_ncl.shape
    x = x_ncl.reshape(N, C, H, W)

    def up_axis(a, axis):
        n = a.shape[axis]
        first = jax.lax.slice_in_dim(a, 0, 1, axis=axis)
        last = jax.lax.slice_in_dim(a, n - 1, n, axis=axis)
        prev = jnp.concatenate(
            [first, jax.lax.slice_in_dim(a, 0, n - 1, axis=axis)], axis=axis)
        nxt = jnp.concatenate(
            [jax.lax.slice_in_dim(a, 1, n, axis=axis), last], axis=axis)
        even = 0.25 * prev + 0.75 * a
        odd = 0.75 * a + 0.25 * nxt
        out = jnp.stack([even, odd], axis=axis + 1)
        shp = list(a.shape)
        shp[axis] = 2 * n
        return out.reshape(shp)

    y = up_axis(up_axis(x, 2), 3)
    return y.reshape(N, C, 4 * H * W)


def data_consistency(pred_nchw, ksp_nchw, mask_nchw):
    # TODO(synk): DataConsistencyLayer source was not provided; standard masked
    # k-space replacement DC is implemented.  FFT has no Pallas equivalent, so
    # this stays in plain JAX.
    k_pred = jnp.fft.fft2(pred_nchw.astype(jnp.complex64), axes=(-2, -1))
    k_out = (1.0 - mask_nchw) * k_pred + mask_nchw * ksp_nchw
    img = jnp.fft.ifft2(k_out, axes=(-2, -1))
    return jnp.abs(img).astype(jnp.float32)


# ---------------------------------------------------------------------------
# Parameter init (deterministic, synthetic, PyTorch layout) + kernel prep
# ---------------------------------------------------------------------------
def _conv_w(key, cout, cin, k):
    fan_in = cin * k * k
    bound = 1.0 / float(fan_in) ** 0.5
    return jax.random.uniform(key, (cout, cin, k, k), jnp.float32, -bound, bound)


def _conv_wb(key, cout, cin, k):
    kw, kb = jax.random.split(key)
    fan_in = cin * k * k
    bound = 1.0 / float(fan_in) ** 0.5
    w = jax.random.uniform(kw, (cout, cin, k, k), jnp.float32, -bound, bound)
    b = jax.random.uniform(kb, (cout,), jnp.float32, -bound, bound)
    return w, b


def init_unet_params(key, in_chans, out_chans, chans, num_pool_layers):
    """PyTorch-layout parameters (Cout, Cin, kh, kw).

    3x3 conv biases are omitted: each 3x3 conv is immediately followed by an
    affine-free InstanceNorm2d whose mean subtraction cancels the bias exactly
    (bit-identical result, less work)."""
    params = {"down": [], "up": []}
    ch = chans
    key, sub = jax.random.split(key)
    params["down"].append(_conv_w(sub, chans, in_chans, 3))
    for _ in range(num_pool_layers - 1):
        key, sub = jax.random.split(key)
        params["down"].append(_conv_w(sub, ch * 2, ch, 3))
        ch *= 2
    key, sub = jax.random.split(key)
    params["conv"] = _conv_w(sub, ch, ch, 3)
    for _ in range(num_pool_layers - 1):
        key, sub = jax.random.split(key)
        params["up"].append(_conv_w(sub, ch // 2, ch * 2, 3))
        ch //= 2
    key, sub = jax.random.split(key)
    params["up"].append(_conv_w(sub, ch, ch * 2, 3))

    key, k1 = jax.random.split(key)
    key, k2 = jax.random.split(key)
    key, k3 = jax.random.split(key)
    params["conv2"] = (
        _conv_wb(k1, ch // 2, ch, 1),
        _conv_wb(k2, out_chans, ch // 2, 1),
        _conv_wb(k3, out_chans, out_chans, 1),
    )
    return params


def prepare_params(params):
    """Convert to kernel-ready operands:
       * 3x3 weights -> bf16 slab (Cout, 9*Cin), K ordered (dy, dx, ci) to
         match the im2col patch ordering.
       * conv2: exact collapse of the three chained 1x1 convs into one
         (Cout, Cin) matrix + (Cout, 1) bias."""
    def slab(w):
        cout, cin = w.shape[0], w.shape[1]
        return (jnp.transpose(w, (0, 2, 3, 1))
                .reshape(cout, 9 * cin).astype(jnp.bfloat16))

    prepared = {
        "down": [slab(w) for w in params["down"]],
        "conv": slab(params["conv"]),
        "up": [slab(w) for w in params["up"]],
    }
    (w1, b1), (w2, b2), (w3, b3) = params["conv2"]
    w1 = w1.reshape(w1.shape[0], w1.shape[1])
    w2 = w2.reshape(w2.shape[0], w2.shape[1])
    w3 = w3.reshape(w3.shape[0], w3.shape[1])
    w_comb = w3 @ w2 @ w1                       # (out_chans, ch)
    b_comb = w3 @ (w2 @ b1 + b2) + b3           # (out_chans,)
    prepared["conv2"] = (w_comb, b_comb.reshape(-1, 1))
    return prepared


# ---------------------------------------------------------------------------
# Full UnetModel forward
# ---------------------------------------------------------------------------
def unet_forward(params, us_query_input, ksp_query_imgs, ksp_mask_query):
    N, in_chans, H0, W0 = us_query_input.shape
    x0 = us_query_input.reshape(N, in_chans, H0 * W0)   # (N, C, L); free reshape

    stack = []
    out, H, W = x0, H0, W0
    for w_slab in params["down"]:
        out = conv_block(out, w_slab, H, W)
        stack.append(out)
        out = max_pool2(out, H, W)
        H, W = H // 2, W // 2

    out = conv_block(out, params["conv"], H, W)

    for w_slab in params["up"]:
        out = upsample2_bilinear(out, H, W)
        H, W = 2 * H, 2 * W
        out = jnp.concatenate([out, stack.pop()], axis=1)   # torch.cat dim=1
        out = conv_block(out, w_slab, H, W)

    w_comb, b_comb = params["conv2"]
    fs_out = conv2_residual(out, w_comb, b_comb, x0)         # + us_query_input

    fs_out_nchw = fs_out.reshape(N, -1, H0, W0)
    return data_consistency(fs_out_nchw, ksp_query_imgs, ksp_mask_query)


# ---------------------------------------------------------------------------
if __name__ == "__main__":
    N, in_chans, out_chans, chans, num_pool_layers = 2, 2, 2, 8, 2
    H, W = 16, 16

    key = jax.random.PRNGKey(0)
    kp, kx, kk, km = jax.random.split(key, 4)

    raw_params = init_unet_params(kp, in_chans, out_chans, chans, num_pool_layers)
    params = prepare_params(raw_params)

    us_query_input = jax.random.normal(kx, (N, in_chans, H, W), jnp.float32)
    ksp_query_imgs = jnp.fft.fft2(
        jax.random.normal(kk, (N, out_chans, H, W), jnp.float32), axes=(-2, -1)
    ).astype(jnp.complex64)
    ksp_mask_query = (jax.random.uniform(km, (N, out_chans, H, W)) > 0.5
                      ).astype(jnp.float32)

    fwd = jax.jit(functools.partial(unet_forward, params))
    out = fwd(us_query_input, ksp_query_imgs, ksp_mask_query)
    jax.block_until_ready(out)
    assert out.shape == (N, out_chans, H, W)
    print("KERNEL_OK")
</pallas_src>

<mosaic_0001>
module attributes {stable_mosaic.version = 11 : i64} {
  func.func @_convblock_kernel(%arg0: i32, %arg1: memref<1x18x256xbf16, #tpu.memory_space<vmem>>, %arg2: memref<8x18xbf16, #tpu.memory_space<vmem>>, %arg3: memref<1x8x256xf32, #tpu.memory_space<vmem>>) attributes {dimension_semantics = [#tpu.dimension_semantics<parallel>], iteration_bounds = array<i64: 2>, scalar_prefetch = 0 : i64, scratch_operands = 0 : i64, tpu.core_type = #tpu.core_type<tc>, window_params = [{transform_indices = @transform_0, window_bounds = array<i64: 1, 18, 256>}, {pipeline_mode = #tpu.pipeline_mode<synchronous>, transform_indices = @transform_1, window_bounds = array<i64: 8, 18>}, {transform_indices = @transform_2, window_bounds = array<i64: 1, 8, 256>}]} {
    %c0 = arith.constant 0 : index
    %c0_0 = arith.constant 0 : index
    %0 = vector.load %arg2[%c0, %c0_0] : memref<8x18xbf16, #tpu.memory_space<vmem>>, vector<8x18xbf16>
    %c0_1 = arith.constant 0 : index
    %c0_2 = arith.constant 0 : index
    %c0_3 = arith.constant 0 : index
    %1 = vector.load %arg1[%c0_1, %c0_2, %c0_3] : memref<1x18x256xbf16, #tpu.memory_space<vmem>>, vector<1x18x256xbf16>
    %2 = vector.shape_cast %1 : vector<1x18x256xbf16> to vector<18x256xbf16>
    %cst = arith.constant dense<0.000000e+00> : vector<8x256xf32>
    %3 = tpu.matmul %0, %2, %cst {dimension_numbers = #tpu.dot_dimension_numbers<[1], [0], [0], [1], [0, 0, 1, 1], [], []>} : vector<8x18xbf16>, vector<18x256xbf16>, vector<8x256xf32> -> vector<8x256xf32>
    %cst_4 = arith.constant dense<0.000000e+00> : vector<8xf32>
    %4 = vector.multi_reduction <add>, %3, %cst_4 [1] : vector<8x256xf32> to vector<8xf32>
    %5 = vector.shape_cast %4 : vector<8xf32> to vector<8x1xf32>
    %cst_5 = arith.constant 2.560000e+02 : f32
    %6 = vector.broadcast %cst_5 : f32 to vector<8x1xf32>
    %7 = arith.divf %5, %6 : vector<8x1xf32>
    %8 = arith.mulf %3, %3 : vector<8x256xf32>
    %cst_6 = arith.constant dense<0.000000e+00> : vector<8xf32>
    %9 = vector.multi_reduction <add>, %8, %cst_6 [1] : vector<8x256xf32> to vector<8xf32>
    %10 = vector.shape_cast %9 : vector<8xf32> to vector<8x1xf32>
    %cst_7 = arith.constant 2.560000e+02 : f32
    %11 = vector.broadcast %cst_7 : f32 to vector<8x1xf32>
    %12 = arith.divf %10, %11 : vector<8x1xf32>
    %13 = arith.mulf %7, %7 : vector<8x1xf32>
    %14 = arith.subf %12, %13 : vector<8x1xf32>
    %15 = vector.broadcast %7 : vector<8x1xf32> to vector<8x256xf32>
    %16 = arith.subf %3, %15 : vector<8x256xf32>
    %cst_8 = arith.constant 9.99999974E-6 : f32
    %17 = vector.broadcast %cst_8 : f32 to vector<8x1xf32>
    %18 = arith.addf %14, %17 : vector<8x1xf32>
    %19 = math.rsqrt %18 : vector<8x1xf32>
    %20 = vector.broadcast %19 : vector<8x1xf32> to vector<8x256xf32>
    %21 = arith.mulf %16, %20 : vector<8x256xf32>
    %cst_9 = arith.constant 0.000000e+00 : f32
    %22 = vector.broadcast %cst_9 : f32 to vector<8x256xf32>
    %23 = arith.maximumf %21, %22 : vector<8x256xf32>
    %c0_10 = arith.constant 0 : index
    %c0_11 = arith.constant 0 : index
    %c0_12 = arith.constant 0 : index
    %24 = vector.load %arg3[%c0_10, %c0_11, %c0_12] : memref<1x8x256xf32, #tpu.memory_space<vmem>>, vector<1x8x256xf32>
    %25 = vector.shape_cast %24 : vector<1x8x256xf32> to vector<8x256xf32>
    %26 = vector.shape_cast %23 : vector<8x256xf32> to vector<1x8x256xf32>
    tpu.vector_store %arg3[%c0_10, %c0_11, %c0_12], %26 {strides = array<i32>} : memref<1x8x256xf32, #tpu.memory_space<vmem>>, vector<1x8x256xf32>,
    return
  }
  func.func @transform_0(%arg0: i32) -> (i32, i32, i32) {
    %c0_i32 = arith.constant 0 : i32
    %c0_i32_0 = arith.constant 0 : i32
    %c0_i32_1 = arith.constant 0 : i32
    return %arg0, %c0_i32, %c0_i32_0 : i32, i32, i32
  }
  func.func @transform_1(%arg0: i32) -> (i32, i32) {
    %c0_i32 = arith.constant 0 : i32
    %c0_i32_0 = arith.constant 0 : i32
    %c0_i32_1 = arith.constant 0 : i32
    return %c0_i32, %c0_i32_0 : i32, i32
  }
  func.func @transform_2(%arg0: i32) -> (i32, i32, i32) {
    %c0_i32 = arith.constant 0 : i32
    %c0_i32_0 = arith.constant 0 : i32
    %c0_i32_1 = arith.constant 0 : i32
    return %arg0, %c0_i32, %c0_i32_0 : i32, i32, i32
  }
}

module attributes {stable_mosaic.version = 11 : i64} {
  func.func @_convblock_kernel(%arg0: i32, %arg1: memref<1x72x64xbf16, #tpu.memory_space<vmem>>, %arg2: memref<16x72xbf16, #tpu.memory_space<vmem>>, %arg3: memref<1x16x64xf32, #tpu.memory_space<vmem>>) attributes {dimension_semantics = [#tpu.dimension_semantics<parallel>], iteration_bounds = array<i64: 2>, scalar_prefetch = 0 : i64, scratch_operands = 0 : i64, tpu.core_type = #tpu.core_type<tc>, window_params = [{transform_indices = @transform_0, window_bounds = array<i64: 1, 72, 64>}, {pipeline_mode = #tpu.pipeline_mode<synchronous>, transform_indices = @transform_1, window_bounds = array<i64: 16, 72>}, {transform_indices = @transform_2, window_bounds = array<i64: 1, 16, 64>}]} {
    %c0 = arith.constant 0 : index
    %c0_0 = arith.constant 0 : index
    %0 = vector.load %arg2[%c0, %c0_0] : memref<16x72xbf16, #tpu.memory_space<vmem>>, vector<16x72xbf16>
    %c0_1 = arith.constant 0 : index
    %c0_2 = arith.constant 0 : index
    %c0_3 = arith.constant 0 : index
    %1 = vector.load %arg1[%c0_1, %c0_2, %c0_3] : memref<1x72x64xbf16, #tpu.memory_space<vmem>>, vector<1x72x64xbf16>
    %2 = vector.shape_cast %1 : vector<1x72x64xbf16> to vector<72x64xbf16>
    %cst = arith.constant dense<0.000000e+00> : vector<16x64xf32>
    %3 = tpu.matmul %0, %2, %cst {dimension_numbers = #tpu.dot_dimension_numbers<[1], [0], [0], [1], [0, 0, 1, 1], [], []>} : vector<16x72xbf16>, vector<72x64xbf16>, vector<16x64xf32> -> vector<16x64xf32>
    %cst_4 = arith.constant dense<0.000000e+00> : vector<16xf32>
    %4 = vector.multi_reduction <add>, %3, %cst_4 [1] : vector<16x64xf32> to vector<16xf32>
    %5 = vector.shape_cast %4 : vector<16xf32> to vector<16x1xf32>
    %cst_5 = arith.constant 6.400000e+01 : f32
    %6 = vector.broadcast %cst_5 : f32 to vector<16x1xf32>
    %7 = arith.divf %5, %6 : vector<16x1xf32>
    %8 = arith.mulf %3, %3 : vector<16x64xf32>
    %cst_6 = arith.constant dense<0.000000e+00> : vector<16xf32>
    %9 = vector.multi_reduction <add>, %8, %cst_6 [1] : vector<16x64xf32> to vector<16xf32>
    %10 = vector.shape_cast %9 : vector<16xf32> to vector<16x1xf32>
    %cst_7 = arith.constant 6.400000e+01 : f32
    %11 = vector.broadcast %cst_7 : f32 to vector<16x1xf32>
    %12 = arith.divf %10, %11 : vector<16x1xf32>
    %13 = arith.mulf %7, %7 : vector<16x1xf32>
    %14 = arith.subf %12, %13 : vector<16x1xf32>
    %15 = vector.broadcast %7 : vector<16x1xf32> to vector<16x64xf32>
    %16 = arith.subf %3, %15 : vector<16x64xf32>
    %cst_8 = arith.constant 9.99999974E-6 : f32
    %17 = vector.broadcast %cst_8 : f32 to vector<16x1xf32>
    %18 = arith.addf %14, %17 : vector<16x1xf32>
    %19 = math.rsqrt %18 : vector<16x1xf32>
    %20 = vector.broadcast %19 : vector<16x1xf32> to vector<16x64xf32>
    %21 = arith.mulf %16, %20 : vector<16x64xf32>
    %cst_9 = arith.constant 0.000000e+00 : f32
    %22 = vector.broadcast %cst_9 : f32 to vector<16x64xf32>
    %23 = arith.maximumf %21, %22 : vector<16x64xf32>
    %c0_10 = arith.constant 0 : index
    %c0_11 = arith.constant 0 : index
    %c0_12 = arith.constant 0 : index
    %24 = vector.load %arg3[%c0_10, %c0_11, %c0_12] : memref<1x16x64xf32, #tpu.memory_space<vmem>>, vector<1x16x64xf32>
    %25 = vector.shape_cast %24 : vector<1x16x64xf32> to vector<16x64xf32>
    %26 = vector.shape_cast %23 : vector<16x64xf32> to vector<1x16x64xf32>
    tpu.vector_store %arg3[%c0_10, %c0_11, %c0_12], %26 {strides = array<i32>} : memref<1x16x64xf32, #tpu.memory_space<vmem>>, vector<1x16x64xf32>,
    return
  }
  func.func @transform_0(%arg0: i32) -> (i32, i32, i32) {
    %c0_i32 = arith.constant 0 : i32
    %c0_i32_0 = arith.constant 0 : i32
    %c0_i32_1 = arith.constant 0 : i32
    return %arg0, %c0_i32, %c0_i32_0 : i32, i32, i32
  }
  func.func @transform_1(%arg0: i32) -> (i32, i32) {
    %c0_i32 = arith.constant 0 : i32
    %c0_i32_0 = arith.constant 0 : i32
    %c0_i32_1 = arith.constant 0 : i32
    return %c0_i32, %c0_i32_0 : i32, i32
  }
  func.func @transform_2(%arg0: i32) -> (i32, i32, i32) {
    %c0_i32 = arith.constant 0 : i32
    %c0_i32_0 = arith.constant 0 : i32
    %c0_i32_1 = arith.constant 0 : i32
    return %arg0, %c0_i32, %c0_i32_0 : i32, i32, i32
  }
}

module attributes {stable_mosaic.version = 11 : i64} {
  func.func @_convblock_kernel(%arg0: i32, %arg1: memref<1x144x16xbf16, #tpu.memory_space<vmem>>, %arg2: memref<16x144xbf16, #tpu.memory_space<vmem>>, %arg3: memref<1x16x16xf32, #tpu.memory_space<vmem>>) attributes {dimension_semantics = [#tpu.dimension_semantics<parallel>], iteration_bounds = array<i64: 2>, scalar_prefetch = 0 : i64, scratch_operands = 0 : i64, tpu.core_type = #tpu.core_type<tc>, window_params = [{transform_indices = @transform_0, window_bounds = array<i64: 1, 144, 16>}, {pipeline_mode = #tpu.pipeline_mode<synchronous>, transform_indices = @transform_1, window_bounds = array<i64: 16, 144>}, {transform_indices = @transform_2, window_bounds = array<i64: 1, 16, 16>}]} {
    %c0 = arith.constant 0 : index
    %c0_0 = arith.constant 0 : index
    %0 = vector.load %arg2[%c0, %c0_0] : memref<16x144xbf16, #tpu.memory_space<vmem>>, vector<16x144xbf16>
    %c0_1 = arith.constant 0 : index
    %c0_2 = arith.constant 0 : index
    %c0_3 = arith.constant 0 : index
    %1 = vector.load %arg1[%c0_1, %c0_2, %c0_3] : memref<1x144x16xbf16, #tpu.memory_space<vmem>>, vector<1x144x16xbf16>
    %2 = vector.shape_cast %1 : vector<1x144x16xbf16> to vector<144x16xbf16>
    %cst = arith.constant dense<0.000000e+00> : vector<16x16xf32>
    %3 = tpu.matmul %0, %2, %cst {dimension_numbers = #tpu.dot_dimension_numbers<[1], [0], [0], [1], [0, 0, 1, 1], [], []>} : vector<16x144xbf16>, vector<144x16xbf16>, vector<16x16xf32> -> vector<16x16xf32>
    %cst_4 = arith.constant dense<0.000000e+00> : vector<16xf32>
    %4 = vector.multi_reduction <add>, %3, %cst_4 [1] : vector<16x16xf32> to vector<16xf32>
    %5 = vector.shape_cast %4 : vector<16xf32> to vector<16x1xf32>
    %cst_5 = arith.constant 1.600000e+01 : f32
    %6 = vector.broadcast %cst_5 : f32 to vector<16x1xf32>
    %7 = arith.divf %5, %6 : vector<16x1xf32>
    %8 = arith.mulf %3, %3 : vector<16x16xf32>
    %cst_6 = arith.constant dense<0.000000e+00> : vector<16xf32>
    %9 = vector.multi_reduction <add>, %8, %cst_6 [1] : vector<16x16xf32> to vector<16xf32>
    %10 = vector.shape_cast %9 : vector<16xf32> to vector<16x1xf32>
    %cst_7 = arith.constant 1.600000e+01 : f32
    %11 = vector.broadcast %cst_7 : f32 to vector<16x1xf32>
    %12 = arith.divf %10, %11 : vector<16x1xf32>
    %13 = arith.mulf %7, %7 : vector<16x1xf32>
    %14 = arith.subf %12, %13 : vector<16x1xf32>
    %15 = vector.broadcast %7 : vector<16x1xf32> to vector<16x16xf32>
    %16 = arith.subf %3, %15 : vector<16x16xf32>
    %cst_8 = arith.constant 9.99999974E-6 : f32
    %17 = vector.broadcast %cst_8 : f32 to vector<16x1xf32>
    %18 = arith.addf %14, %17 : vector<16x1xf32>
    %19 = math.rsqrt %18 : vector<16x1xf32>
    %20 = vector.broadcast %19 : vector<16x1xf32> to vector<16x16xf32>
    %21 = arith.mulf %16, %20 : vector<16x16xf32>
    %cst_9 = arith.constant 0.000000e+00 : f32
    %22 = vector.broadcast %cst_9 : f32 to vector<16x16xf32>
    %23 = arith.maximumf %21, %22 : vector<16x16xf32>
    %c0_10 = arith.constant 0 : index
    %c0_11 = arith.constant 0 : index
    %c0_12 = arith.constant 0 : index
    %24 = vector.load %arg3[%c0_10, %c0_11, %c0_12] : memref<1x16x16xf32, #tpu.memory_space<vmem>>, vector<1x16x16xf32>
    %25 = vector.shape_cast %24 : vector<1x16x16xf32> to vector<16x16xf32>
    %26 = vector.shape_cast %23 : vector<16x16xf32> to vector<1x16x16xf32>
    tpu.vector_store %arg3[%c0_10, %c0_11, %c0_12], %26 {strides = array<i32>} : memref<1x16x16xf32, #tpu.memory_space<vmem>>, vector<1x16x16xf32>,
    return
  }
  func.func @transform_0(%arg0: i32) -> (i32, i32, i32) {
    %c0_i32 = arith.constant 0 : i32
    %c0_i32_0 = arith.constant 0 : i32
    %c0_i32_1 = arith.constant 0 : i32
    return %arg0, %c0_i32, %c0_i32_0 : i32, i32, i32
  }
  func.func @transform_1(%arg0: i32) -> (i32, i32) {
    %c0_i32 = arith.constant 0 : i32
    %c0_i32_0 = arith.constant 0 : i32
    %c0_i32_1 = arith.constant 0 : i32
    return %c0_i32, %c0_i32_0 : i32, i32
  }
  func.func @transform_2(%arg0: i32) -> (i32, i32, i32) {
    %c0_i32 = arith.constant 0 : i32
    %c0_i32_0 = arith.constant 0 : i32
    %c0_i32_1 = arith.constant 0 : i32
    return %arg0, %c0_i32, %c0_i32_0 : i32, i32, i32
  }
}

module attributes {stable_mosaic.version = 11 : i64} {
  func.func @_convblock_kernel(%arg0: i32, %arg1: memref<1x288x64xbf16, #tpu.memory_space<vmem>>, %arg2: memref<8x288xbf16, #tpu.memory_space<vmem>>, %arg3: memref<1x8x64xf32, #tpu.memory_space<vmem>>) attributes {dimension_semantics = [#tpu.dimension_semantics<parallel>], iteration_bounds = array<i64: 2>, scalar_prefetch = 0 : i64, scratch_operands = 0 : i64, tpu.core_type = #tpu.core_type<tc>, window_params = [{transform_indices = @transform_0, window_bounds = array<i64: 1, 288, 64>}, {pipeline_mode = #tpu.pipeline_mode<synchronous>, transform_indices = @transform_1, window_bounds = array<i64: 8, 288>}, {transform_indices = @transform_2, window_bounds = array<i64: 1, 8, 64>}]} {
    %c0 = arith.constant 0 : index
    %c0_0 = arith.constant 0 : index
    %0 = vector.load %arg2[%c0, %c0_0] : memref<8x288xbf16, #tpu.memory_space<vmem>>, vector<8x288xbf16>
    %c0_1 = arith.constant 0 : index
    %c0_2 = arith.constant 0 : index
    %c0_3 = arith.constant 0 : index
    %1 = vector.load %arg1[%c0_1, %c0_2, %c0_3] : memref<1x288x64xbf16, #tpu.memory_space<vmem>>, vector<1x288x64xbf16>
    %2 = vector.shape_cast %1 : vector<1x288x64xbf16> to vector<288x64xbf16>
    %cst = arith.constant dense<0.000000e+00> : vector<8x64xf32>
    %3 = tpu.matmul %0, %2, %cst {dimension_numbers = #tpu.dot_dimension_numbers<[1], [0], [0], [1], [0, 0, 1, 1], [], []>} : vector<8x288xbf16>, vector<288x64xbf16>, vector<8x64xf32> -> vector<8x64xf32>
    %cst_4 = arith.constant dense<0.000000e+00> : vector<8xf32>
    %4 = vector.multi_reduction <add>, %3, %cst_4 [1] : vector<8x64xf32> to vector<8xf32>
    %5 = vector.shape_cast %4 : vector<8xf32> to vector<8x1xf32>
    %cst_5 = arith.constant 6.400000e+01 : f32
    %6 = vector.broadcast %cst_5 : f32 to vector<8x1xf32>
    %7 = arith.divf %5, %6 : vector<8x1xf32>
    %8 = arith.mulf %3, %3 : vector<8x64xf32>
    %cst_6 = arith.constant dense<0.000000e+00> : vector<8xf32>
    %9 = vector.multi_reduction <add>, %8, %cst_6 [1] : vector<8x64xf32> to vector<8xf32>
    %10 = vector.shape_cast %9 : vector<8xf32> to vector<8x1xf32>
    %cst_7 = arith.constant 6.400000e+01 : f32
    %11 = vector.broadcast %cst_7 : f32 to vector<8x1xf32>
    %12 = arith.divf %10, %11 : vector<8x1xf32>
    %13 = arith.mulf %7, %7 : vector<8x1xf32>
    %14 = arith.subf %12, %13 : vector<8x1xf32>
    %15 = vector.broadcast %7 : vector<8x1xf32> to vector<8x64xf32>
    %16 = arith.subf %3, %15 : vector<8x64xf32>
    %cst_8 = arith.constant 9.99999974E-6 : f32
    %17 = vector.broadcast %cst_8 : f32 to vector<8x1xf32>
    %18 = arith.addf %14, %17 : vector<8x1xf32>
    %19 = math.rsqrt %18 : vector<8x1xf32>
    %20 = vector.broadcast %19 : vector<8x1xf32> to vector<8x64xf32>
    %21 = arith.mulf %16, %20 : vector<8x64xf32>
    %cst_9 = arith.constant 0.000000e+00 : f32
    %22 = vector.broadcast %cst_9 : f32 to vector<8x64xf32>
    %23 = arith.maximumf %21, %22 : vector<8x64xf32>
    %c0_10 = arith.constant 0 : index
    %c0_11 = arith.constant 0 : index
    %c0_12 = arith.constant 0 : index
    %24 = vector.load %arg3[%c0_10, %c0_11, %c0_12] : memref<1x8x64xf32, #tpu.memory_space<vmem>>, vector<1x8x64xf32>
    %25 = vector.shape_cast %24 : vector<1x8x64xf32> to vector<8x64xf32>
    %26 = vector.shape_cast %23 : vector<8x64xf32> to vector<1x8x64xf32>
    tpu.vector_store %arg3[%c0_10, %c0_11, %c0_12], %26 {strides = array<i32>} : memref<1x8x64xf32, #tpu.memory_space<vmem>>, vector<1x8x64xf32>,
    return
  }
  func.func @transform_0(%arg0: i32) -> (i32, i32, i32) {
    %c0_i32 = arith.constant 0 : i32
    %c0_i32_0 = arith.constant 0 : i32
    %c0_i32_1 = arith.constant 0 : i32
    return %arg0, %c0_i32, %c0_i32_0 : i32, i32, i32
  }
  func.func @transform_1(%arg0: i32) -> (i32, i32) {
    %c0_i32 = arith.constant 0 : i32
    %c0_i32_0 = arith.constant 0 : i32
    %c0_i32_1 = arith.constant 0 : i32
    return %c0_i32, %c0_i32_0 : i32, i32
  }
  func.func @transform_2(%arg0: i32) -> (i32, i32, i32) {
    %c0_i32 = arith.constant 0 : i32
    %c0_i32_0 = arith.constant 0 : i32
    %c0_i32_1 = arith.constant 0 : i32
    return %arg0, %c0_i32, %c0_i32_0 : i32, i32, i32
  }
}

module attributes {stable_mosaic.version = 11 : i64} {
  func.func @_convblock_kernel(%arg0: i32, %arg1: memref<1x144x256xbf16, #tpu.memory_space<vmem>>, %arg2: memref<8x144xbf16, #tpu.memory_space<vmem>>, %arg3: memref<1x8x256xf32, #tpu.memory_space<vmem>>) attributes {dimension_semantics = [#tpu.dimension_semantics<parallel>], iteration_bounds = array<i64: 2>, scalar_prefetch = 0 : i64, scratch_operands = 0 : i64, tpu.core_type = #tpu.core_type<tc>, window_params = [{transform_indices = @transform_0, window_bounds = array<i64: 1, 144, 256>}, {pipeline_mode = #tpu.pipeline_mode<synchronous>, transform_indices = @transform_1, window_bounds = array<i64: 8, 144>}, {transform_indices = @transform_2, window_bounds = array<i64: 1, 8, 256>}]} {
    %c0 = arith.constant 0 : index
    %c0_0 = arith.constant 0 : index
    %0 = vector.load %arg2[%c0, %c0_0] : memref<8x144xbf16, #tpu.memory_space<vmem>>, vector<8x144xbf16>
    %c0_1 = arith.constant 0 : index
    %c0_2 = arith.constant 0 : index
    %c0_3 = arith.constant 0 : index
    %1 = vector.load %arg1[%c0_1, %c0_2, %c0_3] : memref<1x144x256xbf16, #tpu.memory_space<vmem>>, vector<1x144x256xbf16>
    %2 = vector.shape_cast %1 : vector<1x144x256xbf16> to vector<144x256xbf16>
    %cst = arith.constant dense<0.000000e+00> : vector<8x256xf32>
    %3 = tpu.matmul %0, %2, %cst {dimension_numbers = #tpu.dot_dimension_numbers<[1], [0], [0], [1], [0, 0, 1, 1], [], []>} : vector<8x144xbf16>, vector<144x256xbf16>, vector<8x256xf32> -> vector<8x256xf32>
    %cst_4 = arith.constant dense<0.000000e+00> : vector<8xf32>
    %4 = vector.multi_reduction <add>, %3, %cst_4 [1] : vector<8x256xf32> to vector<8xf32>
    %5 = vector.shape_cast %4 : vector<8xf32> to vector<8x1xf32>
    %cst_5 = arith.constant 2.560000e+02 : f32
    %6 = vector.broadcast %cst_5 : f32 to vector<8x1xf32>
    %7 = arith.divf %5, %6 : vector<8x1xf32>
    %8 = arith.mulf %3, %3 : vector<8x256xf32>
    %cst_6 = arith.constant dense<0.000000e+00> : vector<8xf32>
    %9 = vector.multi_reduction <add>, %8, %cst_6 [1] : vector<8x256xf32> to vector<8xf32>
    %10 = vector.shape_cast %9 : vector<8xf32> to vector<8x1xf32>
    %cst_7 = arith.constant 2.560000e+02 : f32
    %11 = vector.broadcast %cst_7 : f32 to vector<8x1xf32>
    %12 = arith.divf %10, %11 : vector<8x1xf32>
    %13 = arith.mulf %7, %7 : vector<8x1xf32>
    %14 = arith.subf %12, %13 : vector<8x1xf32>
    %15 = vector.broadcast %7 : vector<8x1xf32> to vector<8x256xf32>
    %16 = arith.subf %3, %15 : vector<8x256xf32>
    %cst_8 = arith.constant 9.99999974E-6 : f32
    %17 = vector.broadcast %cst_8 : f32 to vector<8x1xf32>
    %18 = arith.addf %14, %17 : vector<8x1xf32>
    %19 = math.rsqrt %18 : vector<8x1xf32>
    %20 = vector.broadcast %19 : vector<8x1xf32> to vector<8x256xf32>
    %21 = arith.mulf %16, %20 : vector<8x256xf32>
    %cst_9 = arith.constant 0.000000e+00 : f32
    %22 = vector.broadcast %cst_9 : f32 to vector<8x256xf32>
    %23 = arith.maximumf %21, %22 : vector<8x256xf32>
    %c0_10 = arith.constant 0 : index
    %c0_11 = arith.constant 0 : index
    %c0_12 = arith.constant 0 : index
    %24 = vector.load %arg3[%c0_10, %c0_11, %c0_12] : memref<1x8x256xf32, #tpu.memory_space<vmem>>, vector<1x8x256xf32>
    %25 = vector.shape_cast %24 : vector<1x8x256xf32> to vector<8x256xf32>
    %26 = vector.shape_cast %23 : vector<8x256xf32> to vector<1x8x256xf32>
    tpu.vector_store %arg3[%c0_10, %c0_11, %c0_12], %26 {strides = array<i32>} : memref<1x8x256xf32, #tpu.memory_space<vmem>>, vector<1x8x256xf32>,
    return
  }
  func.func @transform_0(%arg0: i32) -> (i32, i32, i32) {
    %c0_i32 = arith.constant 0 : i32
    %c0_i32_0 = arith.constant 0 : i32
    %c0_i32_1 = arith.constant 0 : i32
    return %arg0, %c0_i32, %c0_i32_0 : i32, i32, i32
  }
  func.func @transform_1(%arg0: i32) -> (i32, i32) {
    %c0_i32 = arith.constant 0 : i32
    %c0_i32_0 = arith.constant 0 : i32
    %c0_i32_1 = arith.constant 0 : i32
    return %c0_i32, %c0_i32_0 : i32, i32
  }
  func.func @transform_2(%arg0: i32) -> (i32, i32, i32) {
    %c0_i32 = arith.constant 0 : i32
    %c0_i32_0 = arith.constant 0 : i32
    %c0_i32_1 = arith.constant 0 : i32
    return %arg0, %c0_i32, %c0_i32_0 : i32, i32, i32
  }
}

module attributes {stable_mosaic.version = 11 : i64} {
  func.func @_conv1x1_residual_kernel(%arg0: i32, %arg1: memref<1x8x256xf32, #tpu.memory_space<vmem>>, %arg2: memref<2x8xf32, #tpu.memory_space<vmem>>, %arg3: memref<2x1xf32, #tpu.memory_space<vmem>>, %arg4: memref<1x2x256xf32, #tpu.memory_space<vmem>>, %arg5: memref<1x2x256xf32, #tpu.memory_space<vmem>>) attributes {dimension_semantics = [#tpu.dimension_semantics<parallel>], iteration_bounds = array<i64: 2>, scalar_prefetch = 0 : i64, scratch_operands = 0 : i64, tpu.core_type = #tpu.core_type<tc>, window_params = [{transform_indices = @transform_0, window_bounds = array<i64: 1, 8, 256>}, {pipeline_mode = #tpu.pipeline_mode<synchronous>, transform_indices = @transform_1, window_bounds = array<i64: 2, 8>}, {pipeline_mode = #tpu.pipeline_mode<synchronous>, transform_indices = @transform_2, window_bounds = array<i64: 2, 1>}, {transform_indices = @transform_3, window_bounds = array<i64: 1, 2, 256>}, {transform_indices = @transform_4, window_bounds = array<i64: 1, 2, 256>}]} {
    %c0 = arith.constant 0 : index
    %c0_0 = arith.constant 0 : index
    %0 = vector.load %arg2[%c0, %c0_0] : memref<2x8xf32, #tpu.memory_space<vmem>>, vector<2x8xf32>
    %c0_1 = arith.constant 0 : index
    %c0_2 = arith.constant 0 : index
    %c0_3 = arith.constant 0 : index
    %1 = vector.load %arg1[%c0_1, %c0_2, %c0_3] : memref<1x8x256xf32, #tpu.memory_space<vmem>>, vector<1x8x256xf32>
    %2 = vector.shape_cast %1 : vector<1x8x256xf32> to vector<8x256xf32>
    %cst = arith.constant dense<0.000000e+00> : vector<2x256xf32>
    %3 = tpu.matmul %0, %2, %cst {dimension_numbers = #tpu.dot_dimension_numbers<[1], [0], [0], [1], [0, 0, 1, 1], [], []>} : vector<2x8xf32>, vector<8x256xf32>, vector<2x256xf32> -> vector<2x256xf32>
    %c0_4 = arith.constant 0 : index
    %c0_5 = arith.constant 0 : index
    %4 = vector.load %arg3[%c0_4, %c0_5] : memref<2x1xf32, #tpu.memory_space<vmem>>, vector<2x1xf32>
    %5 = vector.broadcast %4 : vector<2x1xf32> to vector<2x256xf32>
    %6 = arith.addf %3, %5 : vector<2x256xf32>
    %c0_6 = arith.constant 0 : index
    %c0_7 = arith.constant 0 : index
    %c0_8 = arith.constant 0 : index
    %7 = vector.load %arg4[%c0_6, %c0_7, %c0_8] : memref<1x2x256xf32, #tpu.memory_space<vmem>>, vector<1x2x256xf32>
    %8 = vector.shape_cast %7 : vector<1x2x256xf32> to vector<2x256xf32>
    %9 = arith.addf %6, %8 : vector<2x256xf32>
    %c0_9 = arith.constant 0 : index
    %c0_10 = arith.constant 0 : index
    %c0_11 = arith.constant 0 : index
    %10 = vector.load %arg5[%c0_9, %c0_10, %c0_11] : memref<1x2x256xf32, #tpu.memory_space<vmem>>, vector<1x2x256xf32>
    %11 = vector.shape_cast %10 : vector<1x2x256xf32> to vector<2x256xf32>
    %12 = vector.shape_cast %9 : vector<2x256xf32> to vector<1x2x256xf32>
    tpu.vector_store %arg5[%c0_9, %c0_10, %c0_11], %12 {strides = array<i32>} : memref<1x2x256xf32, #tpu.memory_space<vmem>>, vector<1x2x256xf32>,
    return
  }
  func.func @transform_0(%arg0: i32) -> (i32, i32, i32) {
    %c0_i32 = arith.constant 0 : i32
    %c0_i32_0 = arith.constant 0 : i32
    %c0_i32_1 = arith.constant 0 : i32
    return %arg0, %c0_i32, %c0_i32_0 : i32, i32, i32
  }
  func.func @transform_1(%arg0: i32) -> (i32, i32) {
    %c0_i32 = arith.constant 0 : i32
    %c0_i32_0 = arith.constant 0 : i32
    %c0_i32_1 = arith.constant 0 : i32
    return %c0_i32, %c0_i32_0 : i32, i32
  }
  func.func @transform_2(%arg0: i32) -> (i32, i32) {
    %c0_i32 = arith.constant 0 : i32
    %c0_i32_0 = arith.constant 0 : i32
    %c0_i32_1 = arith.constant 0 : i32
    return %c0_i32, %c0_i32_0 : i32, i32
  }
  func.func @transform_3(%arg0: i32) -> (i32, i32, i32) {
    %c0_i32 = arith.constant 0 : i32
    %c0_i32_0 = arith.constant 0 : i32
    %c0_i32_1 = arith.constant 0 : i32
    return %arg0, %c0_i32, %c0_i32_0 : i32, i32, i32
  }
  func.func @transform_4(%arg0: i32) -> (i32, i32, i32) {
    %c0_i32 = arith.constant 0 : i32
    %c0_i32_0 = arith.constant 0 : i32
    %c0_i32_1 = arith.constant 0 : i32
    return %arg0, %c0_i32, %c0_i32_0 : i32, i32, i32
  }
}

</mosaic_0001>

<llo_original>
// kernel: unet_forward.6
$region0: #{unet_forward.6}
  #allocation0 [shape = 'u32[]', space=smem, size = 0x4, offset = 0x4, fixed_abs, tag = 'smem constant byte address 0x4 - core index']
  #allocation1 [shape = 'u32[144,128]{1,0:T(1,128)}', space=vmem, size = 0x12000, scoped, tag = 'internal scratch']
  %s0 = inlined_call_operand.vmem [shape: bf16[2,18,256], index: 0, kind: input, shape index: {}]
  %s1 = inlined_call_operand.hbm [shape: bf16[8,18], index: 1, kind: input, shape index: {}]
  %s2 = inlined_call_operand.vmem [shape: f32[2,8,256], index: 2, kind: output, shape index: {}]
  %s3 = sld [smem:[#allocation0]]
  $region45: #{unet_forward.6} parent=0
    _
  %s5 = ssub.s32 1, %s3
  %s6 = scalar_select 0, %s5, %s3
  $region1: #{unet_forward.6} parent=0
    #allocation2 [shape = 'u8[2048]{0}', space=vmem, size = 0x800, scoped, tag = 'input window, operand 1, single buffered']
    #allocation3 [shape = 's32[2]{0}', space=sflag, size = 0x8, scoped, tag = 'scoped memory for unet_forward.6']
    %7 = vsyncpa [#allocation3], 0
    loop: start=0, step=1, limit=4
    $region2: #{unet_forward.6} parent=1 // loop_pre_header
      _
    $region3: #{unet_forward.6} parent=1 // loop_header
      %s9 = sphi 0, %s13
      %p10 = scmp.ge.s32.totalorder %s9, 4
      %s19 = sphi 0, %s21
      %s22 = sphi 0, %s19
      %s23 = sphi 0, %s22
      %s39 = sphi 0, %s23
      %s43 = sphi 0, %s43
      %s45 = sphi 0, %s43
      %s46 = sphi 0, %s45
      %s60 = sphi 0, %s46
      %s66 = sphi 0, %s68
      %s69 = sphi 0, %s66
      %s70 = sphi 0, %s69
      %s86 = sphi 0, %s70
    $region4: #{unet_forward.6} parent=1 // loop_header_branch
      %12 = sbr.rel (%p10) target = $region8
    $region5: #{unet_forward.6} parent=1 // loop_body
      %s14 = ssub.s32 %s9, 1
      %s15 = ssub.s32 %s9, 2
      %s16 = sadd.s32 %s9, 1
      %s17 = ssub.s32 %s9, %s16
      %p18 = scmp.eq.s32.totalorder %s17, 0
      %s20 = sadd.s32 %s19, 1
      %s21 = scalar_select %p18, %s19, %s20
      %p24 = pneg %p18
      %p25 = scmp.eq.s32.totalorder %s9, 1
      %p26 = por %p24, %p25
      %p27 = scmp.ne.s32.totalorder %s19, %s22
      %p28 = scmp.eq.s32.totalorder %s9, 0
      %p29 = por %p27, %p28
      %p30 = scmp.ne.s32.totalorder %s19, %s22
      %p31 = scmp.eq.s32.totalorder %s14, 1
      %p32 = por %p30, %p31
      %p33 = scmp.ne.s32.totalorder %s22, %s23
      %p34 = scmp.eq.s32.totalorder %s14, 0
      %p35 = por %p33, %p34
      %p36 = scmp.ne.s32.totalorder %s22, %s23
      %p37 = scmp.eq.s32.totalorder %s15, 1
      %p38 = por %p36, %p37
      %p40 = scmp.ne.s32.totalorder %s23, %s39
      %p41 = scmp.eq.s32.totalorder %s15, 0
      %p42 = por %p40, %p41
      %s44 = sadd.s32 %s43, 1
      %p47 = scmp.eq.s32.totalorder %s9, 1
      %p48 = scmp.ne.s32.totalorder %s43, %s45
      %p49 = scmp.eq.s32.totalorder %s9, 0
      %p50 = por %p48, %p49
      %p51 = scmp.ne.s32.totalorder %s43, %s45
      %p52 = scmp.eq.s32.totalorder %s14, 1
      %p53 = por %p51, %p52
      %p54 = scmp.ne.s32.totalorder %s45, %s46
      %p55 = scmp.eq.s32.totalorder %s14, 0
      %p56 = por %p54, %p55
      %p57 = scmp.ne.s32.totalorder %s45, %s46
      %p58 = scmp.eq.s32.totalorder %s15, 1
      %p59 = por %p57, %p58
      %p61 = scmp.ne.s32.totalorder %s46, %s60
      %p62 = scmp.eq.s32.totalorder %s15, 0
      %p63 = por %p61, %p62
      %s64 = ssub.s32 %s9, %s16
      %p65 = scmp.eq.s32.totalorder %s64, 0
      %s67 = sadd.s32 %s66, 1
      %s68 = scalar_select %p65, %s66, %s67
      %p71 = pneg %p65
      %p72 = scmp.eq.s32.totalorder %s9, 1
      %p73 = por %p71, %p72
      %p74 = scmp.ne.s32.totalorder %s66, %s69
      %p75 = scmp.eq.s32.totalorder %s9, 0
      %p76 = por %p74, %p75
      %p77 = scmp.ne.s32.totalorder %s66, %s69
      %p78 = scmp.eq.s32.totalorder %s14, 1
      %p79 = por %p77, %p78
      %p80 = scmp.ne.s32.totalorder %s69, %s70
      %p81 = scmp.eq.s32.totalorder %s14, 0
      %p82 = por %p80, %p81
      %p83 = scmp.ne.s32.totalorder %s69, %s70
      %p84 = scmp.eq.s32.totalorder %s15, 1
      %p85 = por %p83, %p84
      %p87 = scmp.ne.s32.totalorder %s70, %s86
      %p88 = scmp.eq.s32.totalorder %s15, 0
      %p89 = por %p87, %p88
      %p90 = scmp.le.s32.totalorder 1, %s9
      %p91 = scmp.lt.s32.totalorder %s9, 3
      %p92 = pnand %p90, %p91
      %p93 = pneg %p92
      // Predicated region
      $region9: #{unet_forward.6} parent=5 // pred_check
        _
      $region10: #{unet_forward.6} parent=5 // pred_check_branch
        %95 = sbr.rel (%p92) target = $region12
      $region11: #{unet_forward.6} parent=5 // pred_region
        %s96 = ssub.s32 %s9, 1
        // Predicated region
        $region13: #{unet_forward.6} parent=11 // pred_check
          %p97 = pneg %p56
        $region14: #{unet_forward.6} parent=11 // pred_check_branch
          %99 = sbr.rel (%p97) target = $region16
        $region15: #{unet_forward.6} parent=11 // pred_region
          %s101 = ssub.s32 64, 64
          %102 = vsyncadd [#allocation3], %s101
          %s104 = sshll.u32 [#allocation2], 4
          %s105 = int_to_ptr.vmem [resolvable:$true] %s104
          %107 = dma.hbm_to_vmem [thread:$0]  %s1, 64, %s105, [#allocation3]
        $region16: #{unet_forward.6} parent=11 // pred_fallthru
          _
      $region12: #{unet_forward.6} parent=5 // pred_fallthru
        _
      %p108 = scmp.lt.s32.totalorder %s9, 2
      // Predicated region
      $region17: #{unet_forward.6} parent=5 // pred_check
        %p109 = pneg %p108
      $region18: #{unet_forward.6} parent=5 // pred_check_branch
        %111 = sbr.rel (%p109) target = $region20
      $region19: #{unet_forward.6} parent=5 // pred_region
        // Predicated region
        $region21: #{unet_forward.6} parent=19 // pred_check
          %p112 = pneg %p29
        $region22: #{unet_forward.6} parent=19 // pred_check_branch
          %114 = sbr.rel (%p112) target = $region24
        $region23: #{unet_forward.6} parent=19 // pred_region
          %p115 = scmp.lt.s32.totalorder %s9, 1
          %s116 = scalar_select %p115, %s9, 1
          %s117 = smul.addr %s116, 6
          %s118 = smul.addr %s117, 4
          %s119 = scalar_lea.vmem %s0, %s118
        $region24: #{unet_forward.6} parent=19 // pred_fallthru
          _
      $region20: #{unet_forward.6} parent=5 // pred_fallthru
        _
      %p120 = scmp.le.s32.totalorder 1, %s9
      %p121 = scmp.lt.s32.totalorder %s9, 3
      %p122 = pnand %p120, %p121
      %p123 = pneg %p122
      // Predicated region
      $region25: #{unet_forward.6} parent=5 // pred_check
        _
      $region26: #{unet_forward.6} parent=5 // pred_check_branch
        %125 = sbr.rel (%p122) target = $region28
      $region27: #{unet_forward.6} parent=5 // pred_region
        %s126 = ssub.s32 %s9, 1
        // Predicated region
        $region29: #{unet_forward.6} parent=27 // pred_check
          %p127 = pneg %p56
        $region30: #{unet_forward.6} parent=27 // pred_check_branch
          %129 = sbr.rel (%p127) target = $region32
        $region31: #{unet_forward.6} parent=27 // pred_region
          %130 = dma.done [#allocation3], 64
        $region32: #{unet_forward.6} parent=27 // pred_fallthru
          _
        %p131 = scmp.lt.s32.totalorder %s14, 1
        %s132 = scalar_select %p131, %s14, 1
        %s133 = smul.addr %s132, 6
        %s134 = smul.addr %s133, 4
        %s135 = scalar_lea.vmem %s0, %s134
        %p136 = pneg %p35
        %p137 = pneg %p32
        %p138 = pneg %p56
        %p139 = pneg %p53
        %p140 = pneg %p82
        %p141 = pneg %p79
        %p142 = scmp.lt.s32.totalorder %s14, 1
        %s143 = scalar_select %p142, %s14, 1
        %s144 = smul.addr %s143, 2
        %s145 = smul.addr %s144, 8
        %s146 = scalar_lea.vmem %s2, %s145
        %p147 = scmp.lt.s32.totalorder %s14, 1
        %s148 = scalar_select %p147, %s14, 1
        %s149 = smul.addr %s148, 6
        %s150 = smul.addr %s149, 4
        %s151 = scalar_lea.vmem %s0, %s150
        %p152 = scmp.lt.s32.totalorder %s14, 1
        %s153 = scalar_select %p152, %s14, 1
        %s154 = smul.addr %s153, 2
        %s155 = smul.addr %s154, 8
        %s156 = scalar_lea.vmem %s2, %s155
        %v158 = vld [vmem:[#allocation2] sm:$0xf]
        %v159 = vld [vmem:[%s151] sm:$0xff]
        %v160 = vld [vmem:[%s151 + $0x8] sm:$0xff]
        %v161 = vld [vmem:[%s151 + $0x10] sm:$0x11]
        %v165 = vunpack.c.l.b16 %v159
        %v166 = vunpack.c.h.b16 %v159
        %v167 = vunpack.c.l.b16 %v160
        %v168 = vunpack.c.h.b16 %v160
        %v169 = vunpack.c.l.b16 %v161
        %v170 = vunpack.c.h.b16 %v161
        %v171 = vpack.c.b16 %v167, %v165
        %v172 = vpack.c.b16 %v168, %v166
        %v173 = vpack.c.b16 %v169, %v169
        %v174 = vpack.c.b16 %v170, %v170
        %vm177 = vcmask 146432
        %v179 = vsel %vm177, %v158, 0
        %vm181 = vcmask 1040384
        %v183 = vsel %vm181, %v173, 0
        %v186 = vsel %vm181, %v174, 0
        %188 = vmatprep.subr.bf16.mxu0 0
        %189 = vmatpush1.bf16.msra.mxu0 0
        %190 = vmatprep.subr.bf16.mxu0 0
        %191 = vmatpush1.bf16.msra.mxu0 0
        %192 = vmatprep.subr.bf16.mxu0 0
        %193 = vmatpush1.bf16.msra.mxu0 0
        %194 = vmatprep.subr.bf16.mxu0 0
        %195 = vmatpush1.bf16.msra.mxu0 0
        %196 = vmatprep.subr.bf16.mxu0 0
        %197 = vmatpush1.bf16.msra.mxu0 0
        %198 = vmatprep.subr.bf16.mxu0 0
        %199 = vmatpush1.bf16.msra.mxu0 0
        %200 = vmatprep.subr.bf16.mxu0 %v186
        %201 = vmatpush1.bf16.msra.mxu0 %v183
        %202 = vmatprep.subr.bf16.mxu0 %v172
        %203 = vmatpush1.bf16.msra.mxu0 %v171
        %204 = vmatprep.subr.bf16.mxu0 0
        %205 = vmatpush2.bf16.msra.mxu0 0
        %206 = vmatprep.subr.bf16.mxu0 0
        %207 = vmatpush2.bf16.msra.mxu0 0
        %208 = vmatprep.subr.bf16.mxu0 0
        %209 = vmatpush2.bf16.msra.mxu0 0
        %210 = vmatprep.subr.bf16.mxu0 0
        %211 = vmatpush2.bf16.msra.mxu0 0
        %212 = vmatprep.subr.bf16.mxu0 0
        %213 = vmatpush2.bf16.msra.mxu0 0
        %214 = vmatprep.subr.bf16.mxu0 0
        %215 = vmatpush2.bf16.msra.mxu0 0
        %216 = vmatprep.subr.bf16.mxu0 0
        %217 = vmatpush2.bf16.msra.mxu0 0
        %218 = vmatprep.subr.bf16.mxu0 0
        %219 = vmatpush2.bf16.msra.mxu0 0
        %220 = vmatprep.mubr.bf16.mxu0 0
        %221 = vmatmul.mubr.bf16.gmra.mxu0 %v179
        %v222 = vpop.f32.mrf.mxu0
        %v223 = vadd.f32 0.0, %v222
        %v224 = vpop.f32.mrf.mxu0
        %v225 = vadd.f32 0.0, %v224
        %v226 = vpop.f32.mrf.mxu0
        %v227 = vpop.f32.mrf.mxu0
        %228 = vdwg.mxu0
        %v229 = vadd.f32 %v223, %v225
        %230 = vadd.xlane.f32.xlu0 %v229
        %v231 = vpop.xlane.xlu0 %230
        %v232 = vrcp.pop 256.0
        %v233 = vmul.f32 %v231, %v232
        %v234 = vmul.f32 %v223, %v223
        %v235 = vmul.f32 %v225, %v225
        %v236 = vadd.f32 %v234, %v235
        %237 = vadd.xlane.f32.xlu0 %v236
        %v238 = vpop.xlane.xlu0 %237
        %v239 = vmul.f32 %v238, %v232
        %v240 = vmul.f32 %v233, %v233
        %v241 = vsub.f32 %v239, %v240
        %v242 = vsub.f32 %v223, %v233
        %v243 = vsub.f32 %v225, %v233
        %v244 = vadd.f32 %v241, 1e-05
        %v245 = vrsqrt.pop %v244
        %v246 = vmul.f32 %v242, %v245
        %v247 = vmul.f32 %v243, %v245
        %v248 = vmax.f32 %v246, 0.0
        %v249 = vmax.f32 %v247, 0.0
        %250 = vst [vmem:[%s156] sm:$0xff] %v248
        %251 = vst [vmem:[%s156 + $0x8] sm:$0xff] %v249
        %p252 = scmp.lt.s32.totalorder %s14, 1
        %s253 = scalar_select %p252, %s14, 1
        %s254 = smul.addr %s253, 2
        %s255 = smul.addr %s254, 8
        %s256 = scalar_lea.vmem %s2, %s255
        // Predicated region
        $region33: #{unet_forward.6} parent=27 // pred_check
          %p257 = pneg %p79
        $region34: #{unet_forward.6} parent=27 // pred_check_branch
          %259 = sbr.rel (%p257) target = $region36
        $region35: #{unet_forward.6} parent=27 // pred_region
          _
        $region36: #{unet_forward.6} parent=27 // pred_fallthru
          _
      $region28: #{unet_forward.6} parent=5 // pred_fallthru
        _
      %p260 = scmp.le.s32.totalorder 2, %s9
      // Predicated region
      $region37: #{unet_forward.6} parent=5 // pred_check
        %p261 = pneg %p260
      $region38: #{unet_forward.6} parent=5 // pred_check_branch
        %263 = sbr.rel (%p261) target = $region40
      $region39: #{unet_forward.6} parent=5 // pred_region
        %s264 = ssub.s32 %s9, 2
        // Predicated region
        $region41: #{unet_forward.6} parent=39 // pred_check
          %p265 = pneg %p85
        $region42: #{unet_forward.6} parent=39 // pred_check_branch
          %267 = sbr.rel (%p265) target = $region44
        $region43: #{unet_forward.6} parent=39 // pred_region
          %p268 = scmp.lt.s32.totalorder %s15, 1
          %s269 = scalar_select %p268, %s15, 1
          %s270 = smul.addr %s269, 2
          %s271 = smul.addr %s270, 8
          %s272 = scalar_lea.vmem %s2, %s271
        $region44: #{unet_forward.6} parent=39 // pred_fallthru
          _
      $region40: #{unet_forward.6} parent=5 // pred_fallthru
        _
    $region6: #{unet_forward.6} parent=1 // loop_footer
      %s13 = sadd.s32 1, %s9
    $region7: #{unet_forward.6} parent=1 // loop_footer_branch
      %8 = sbr.rel target = $region3
    $region8: #{unet_forward.6} parent=1 // loop_exit
      _
    %273 = vsyncpa [#allocation3], 1
    %s274 = scalar_lea.sflag [#allocation3], 1
    %275 = vsyncpa %s274, 1

// kernel: unet_forward.7
$region0: #{unet_forward.7}
  #allocation0 [shape = 'u32[]', space=smem, size = 0x4, offset = 0x4, fixed_abs, tag = 'smem constant byte address 0x4 - core index']
  #allocation1 [shape = 'u32[144,128]{1,0:T(1,128)}', space=vmem, size = 0x12000, scoped, tag = 'internal scratch']
  %s0 = inlined_call_operand.vmem [shape: bf16[2,72,64], index: 0, kind: input, shape index: {}]
  %s1 = inlined_call_operand.vmem [shape: bf16[16,72], index: 1, kind: input, shape index: {}]
  %s2 = inlined_call_operand.vmem [shape: f32[2,16,64], index: 2, kind: output, shape index: {}]
  %s3 = sld [smem:[#allocation0]]
  $region41: #{unet_forward.7} parent=0
    _
  %s5 = ssub.s32 1, %s3
  %s6 = scalar_select 0, %s5, %s3
  loop: start=0, step=1, limit=4
  $region2: #{unet_forward.7} parent=0 // loop_pre_header
    _
  $region3: #{unet_forward.7} parent=0 // loop_header
    %s8 = sphi 0, %s12
    %p9 = scmp.ge.s32.totalorder %s8, 4
    %s18 = sphi 0, %s20
    %s21 = sphi 0, %s18
    %s22 = sphi 0, %s21
    %s38 = sphi 0, %s22
    %s42 = sphi 0, %s42
    %s44 = sphi 0, %s42
    %s45 = sphi 0, %s44
    %s59 = sphi 0, %s45
    %s65 = sphi 0, %s67
    %s68 = sphi 0, %s65
    %s69 = sphi 0, %s68
    %s85 = sphi 0, %s69
  $region4: #{unet_forward.7} parent=0 // loop_header_branch
    %11 = sbr.rel (%p9) target = $region8
  $region5: #{unet_forward.7} parent=0 // loop_body
    %s13 = ssub.s32 %s8, 1
    %s14 = ssub.s32 %s8, 2
    %s15 = sadd.s32 %s8, 1
    %s16 = ssub.s32 %s8, %s15
    %p17 = scmp.eq.s32.totalorder %s16, 0
    %s19 = sadd.s32 %s18, 1
    %s20 = scalar_select %p17, %s18, %s19
    %p23 = pneg %p17
    %p24 = scmp.eq.s32.totalorder %s8, 1
    %p25 = por %p23, %p24
    %p26 = scmp.ne.s32.totalorder %s18, %s21
    %p27 = scmp.eq.s32.totalorder %s8, 0
    %p28 = por %p26, %p27
    %p29 = scmp.ne.s32.totalorder %s18, %s21
    %p30 = scmp.eq.s32.totalorder %s13, 1
    %p31 = por %p29, %p30
    %p32 = scmp.ne.s32.totalorder %s21, %s22
    %p33 = scmp.eq.s32.totalorder %s13, 0
    %p34 = por %p32, %p33
    %p35 = scmp.ne.s32.totalorder %s21, %s22
    %p36 = scmp.eq.s32.totalorder %s14, 1
    %p37 = por %p35, %p36
    %p39 = scmp.ne.s32.totalorder %s22, %s38
    %p40 = scmp.eq.s32.totalorder %s14, 0
    %p41 = por %p39, %p40
    %s43 = sadd.s32 %s42, 1
    %p46 = scmp.eq.s32.totalorder %s8, 1
    %p47 = scmp.ne.s32.totalorder %s42, %s44
    %p48 = scmp.eq.s32.totalorder %s8, 0
    %p49 = por %p47, %p48
    %p50 = scmp.ne.s32.totalorder %s42, %s44
    %p51 = scmp.eq.s32.totalorder %s13, 1
    %p52 = por %p50, %p51
    %p53 = scmp.ne.s32.totalorder %s44, %s45
    %p54 = scmp.eq.s32.totalorder %s13, 0
    %p55 = por %p53, %p54
    %p56 = scmp.ne.s32.totalorder %s44, %s45
    %p57 = scmp.eq.s32.totalorder %s14, 1
    %p58 = por %p56, %p57
    %p60 = scmp.ne.s32.totalorder %s45, %s59
    %p61 = scmp.eq.s32.totalorder %s14, 0
    %p62 = por %p60, %p61
    %s63 = ssub.s32 %s8, %s15
    %p64 = scmp.eq.s32.totalorder %s63, 0
    %s66 = sadd.s32 %s65, 1
    %s67 = scalar_select %p64, %s65, %s66
    %p70 = pneg %p64
    %p71 = scmp.eq.s32.totalorder %s8, 1
    %p72 = por %p70, %p71
    %p73 = scmp.ne.s32.totalorder %s65, %s68
    %p74 = scmp.eq.s32.totalorder %s8, 0
    %p75 = por %p73, %p74
    %p76 = scmp.ne.s32.totalorder %s65, %s68
    %p77 = scmp.eq.s32.totalorder %s13, 1
    %p78 = por %p76, %p77
    %p79 = scmp.ne.s32.totalorder %s68, %s69
    %p80 = scmp.eq.s32.totalorder %s13, 0
    %p81 = por %p79, %p80
    %p82 = scmp.ne.s32.totalorder %s68, %s69
    %p83 = scmp.eq.s32.totalorder %s14, 1
    %p84 = por %p82, %p83
    %p86 = scmp.ne.s32.totalorder %s69, %s85
    %p87 = scmp.eq.s32.totalorder %s14, 0
    %p88 = por %p86, %p87
    %p89 = scmp.le.s32.totalorder 1, %s8
    %p90 = scmp.lt.s32.totalorder %s8, 3
    %p91 = pnand %p89, %p90
    %p92 = pneg %p91
    // Predicated region
    $region9: #{unet_forward.7} parent=5 // pred_check
      _
    $region10: #{unet_forward.7} parent=5 // pred_check_branch
      %94 = sbr.rel (%p91) target = $region12
    $region11: #{unet_forward.7} parent=5 // pred_region
      %s95 = ssub.s32 %s8, 1
      // Predicated region
      $region13: #{unet_forward.7} parent=11 // pred_check
        %p96 = pneg %p55
      $region14: #{unet_forward.7} parent=11 // pred_check_branch
        %98 = sbr.rel (%p96) target = $region16
      $region15: #{unet_forward.7} parent=11 // pred_region
        _
      $region16: #{unet_forward.7} parent=11 // pred_fallthru
        _
    $region12: #{unet_forward.7} parent=5 // pred_fallthru
      _
    %p99 = scmp.lt.s32.totalorder %s8, 2
    // Predicated region
    $region17: #{unet_forward.7} parent=5 // pred_check
      %p100 = pneg %p99
    $region18: #{unet_forward.7} parent=5 // pred_check_branch
      %102 = sbr.rel (%p100) target = $region20
    $region19: #{unet_forward.7} parent=5 // pred_region
      // Predicated region
      $region21: #{unet_forward.7} parent=19 // pred_check
        %p103 = pneg %p28
      $region22: #{unet_forward.7} parent=19 // pred_check_branch
        %105 = sbr.rel (%p103) target = $region24
      $region23: #{unet_forward.7} parent=19 // pred_region
        %p106 = scmp.lt.s32.totalorder %s8, 1
        %s107 = scalar_select %p106, %s8, 1
        %s108 = smul.addr %s107, 9
        %s109 = smul.addr %s108, 4
        %s110 = scalar_lea.vmem %s0, %s109
      $region24: #{unet_forward.7} parent=19 // pred_fallthru
        _
    $region20: #{unet_forward.7} parent=5 // pred_fallthru
      _
    %p111 = scmp.le.s32.totalorder 1, %s8
    %p112 = scmp.lt.s32.totalorder %s8, 3
    %p113 = pnand %p111, %p112
    %p114 = pneg %p113
    // Predicated region
    $region25: #{unet_forward.7} parent=5 // pred_check
      _
    $region26: #{unet_forward.7} parent=5 // pred_check_branch
      %116 = sbr.rel (%p113) target = $region28
    $region27: #{unet_forward.7} parent=5 // pred_region
      %s117 = ssub.s32 %s8, 1
      %p118 = scmp.lt.s32.totalorder %s13, 1
      %s119 = scalar_select %p118, %s13, 1
      %s120 = smul.addr %s119, 9
      %s121 = smul.addr %s120, 4
      %s122 = scalar_lea.vmem %s0, %s121
      %p123 = pneg %p34
      %p124 = pneg %p31
      %p125 = pneg %p55
      %p126 = pneg %p52
      %p127 = pneg %p81
      %p128 = pneg %p78
      %p129 = scmp.lt.s32.totalorder %s13, 1
      %s130 = scalar_select %p129, %s13, 1
      %s131 = smul.addr %s130, 2
      %s132 = smul.addr %s131, 8
      %s133 = scalar_lea.vmem %s2, %s132
      %p134 = scmp.lt.s32.totalorder %s13, 1
      %s135 = scalar_select %p134, %s13, 1
      %s136 = smul.addr %s135, 9
      %s137 = smul.addr %s136, 4
      %s138 = scalar_lea.vmem %s0, %s137
      %p139 = scmp.lt.s32.totalorder %s13, 1
      %s140 = scalar_select %p139, %s13, 1
      %s141 = smul.addr %s140, 2
      %s142 = smul.addr %s141, 8
      %s143 = scalar_lea.vmem %s2, %s142
      %v145 = vld [vmem:[%s1] sm:$0xf]
      %v146 = vld [vmem:[%s1 + $0x4] sm:$0xf]
      %v147 = vld [vmem:[%s138] sm:$0xf]
      %v148 = vld [vmem:[%s138 + $0x4] sm:$0xf]
      %v149 = vld [vmem:[%s138 + $0x8] sm:$0xf]
      %v150 = vld [vmem:[%s138 + $0xc] sm:$0xf]
      %v151 = vld [vmem:[%s138 + $0x10] sm:$0xf]
      %v152 = vld [vmem:[%s138 + $0x14] sm:$0xf]
      %v153 = vld [vmem:[%s138 + $0x18] sm:$0xf]
      %v154 = vld [vmem:[%s138 + $0x1c] sm:$0xf]
      %v155 = vld [vmem:[%s138 + $0x20] sm:$0xf]
      %v158 = vunpack.c.l.b16 %v145
      %v159 = vunpack.c.l.b16 %v146
      %v160 = vpack.c.b16 %v159, %v158
      %v170 = vunpack.c.l.b16 %v147
      %v171 = vunpack.c.l.b16 %v148
      %v172 = vunpack.c.l.b16 %v149
      %v173 = vunpack.c.l.b16 %v150
      %v174 = vunpack.c.l.b16 %v151
      %v175 = vunpack.c.l.b16 %v152
      %v176 = vunpack.c.l.b16 %v153
      %v177 = vunpack.c.l.b16 %v154
      %v178 = vunpack.c.l.b16 %v155
      %v179 = vpack.c.b16 %v171, %v170
      %v180 = vpack.c.b16 %v173, %v172
      %v181 = vpack.c.b16 %v175, %v174
      %v182 = vpack.c.b16 %v177, %v176
      %v183 = vpack.c.b16 %v178, %v178
      %vm188 = vcmask 588800
      %v190 = vsel %vm188, %v160, 0
      %vm192 = vcmask 1043456
      %v194 = vsel %vm192, %v183, 0
      %196 = vmatprep.subr.bf16.mxu0 0
      %197 = vmatpush1.bf16.msra.mxu0 0
      %198 = vmatprep.subr.bf16.mxu0 0
      %199 = vmatpush1.bf16.msra.mxu0 0
      %200 = vmatprep.subr.bf16.mxu0 0
      %201 = vmatpush1.bf16.msra.mxu0 0
      %202 = vmatprep.subr.bf16.mxu0 0
      %203 = vmatpush1.bf16.msra.mxu0 %v194
      %204 = vmatprep.subr.bf16.mxu0 0
      %205 = vmatpush1.bf16.msra.mxu0 %v182
      %206 = vmatprep.subr.bf16.mxu0 0
      %207 = vmatpush1.bf16.msra.mxu0 %v181
      %208 = vmatprep.subr.bf16.mxu0 0
      %209 = vmatpush1.bf16.msra.mxu0 %v180
      %210 = vmatprep.subr.bf16.mxu0 0
      %211 = vmatpush1.bf16.msra.mxu0 %v179
      %212 = vmatprep.subr.bf16.mxu0 0
      %213 = vmatpush2.bf16.msra.mxu0 0
      %214 = vmatprep.subr.bf16.mxu0 0
      %215 = vmatpush2.bf16.msra.mxu0 0
      %216 = vmatprep.subr.bf16.mxu0 0
      %217 = vmatpush2.bf16.msra.mxu0 0
      %218 = vmatprep.subr.bf16.mxu0 0
      %219 = vmatpush2.bf16.msra.mxu0 0
      %220 = vmatprep.subr.bf16.mxu0 0
      %221 = vmatpush2.bf16.msra.mxu0 0
      %222 = vmatprep.subr.bf16.mxu0 0
      %223 = vmatpush2.bf16.msra.mxu0 0
      %224 = vmatprep.subr.bf16.mxu0 0
      %225 = vmatpush2.bf16.msra.mxu0 0
      %226 = vmatprep.subr.bf16.mxu0 0
      %227 = vmatpush2.bf16.msra.mxu0 0
      %228 = vmatprep.mubr.bf16.mxu0 0
      %229 = vmatmul.mubr.bf16.gmra.mxu0 %v190
      %v230 = vpop.f32.mrf.mxu0
      %v231 = vadd.f32 0.0, %v230
      %v232 = vpop.f32.mrf.mxu0
      %v233 = vpop.f32.mrf.mxu0
      %v234 = vadd.f32 0.0, %v233
      %v235 = vpop.f32.mrf.mxu0
      %236 = vdwg.mxu0
      %vm237 = vcmask 523264
      %v238 = vsel %vm237, %v231, 0.0
      %239 = vadd.xlane.f32.xlu0 %v238
      %v240 = vpop.xlane.xlu0 %239
      %v241 = vsel %vm237, %v234, 0.0
      %242 = vadd.xlane.f32.xlu0 %v241
      %v243 = vpop.xlane.xlu0 %242
      %v244 = vrcp.pop 64.0
      %v245 = vmul.f32 %v240, %v244
      %v246 = vmul.f32 %v243, %v244
      %v247 = vmul.f32 %v231, %v231
      %v248 = vmul.f32 %v234, %v234
      %v249 = vsel %vm237, %v247, 0.0
      %250 = vadd.xlane.f32.xlu0 %v249
      %v251 = vpop.xlane.xlu0 %250
      %v252 = vsel %vm237, %v248, 0.0
      %253 = vadd.xlane.f32.xlu0 %v252
      %v254 = vpop.xlane.xlu0 %253
      %v255 = vmul.f32 %v251, %v244
      %v256 = vmul.f32 %v254, %v244
      %v257 = vmul.f32 %v245, %v245
      %v258 = vmul.f32 %v246, %v246
      %v259 = vsub.f32 %v255, %v257
      %v260 = vsub.f32 %v256, %v258
      %v261 = vsub.f32 %v231, %v245
      %v262 = vsub.f32 %v234, %v246
      %v263 = vadd.f32 %v259, 1e-05
      %v264 = vadd.f32 %v260, 1e-05
      %v265 = vrsqrt.pop %v263
      %v266 = vrsqrt.pop %v264
      %v267 = vmul.f32 %v261, %v265
      %v268 = vmul.f32 %v262, %v266
      %v269 = vmax.f32 %v267, 0.0
      %v270 = vmax.f32 %v268, 0.0
      %271 = vst.msk [vmem:[%s143] sm:$0xff] %vm237, %v269
      %272 = vst.msk [vmem:[%s143 + $0x8] sm:$0xff] %vm237, %v270
      %p273 = scmp.lt.s32.totalorder %s13, 1
      %s274 = scalar_select %p273, %s13, 1
      %s275 = smul.addr %s274, 2
      %s276 = smul.addr %s275, 8
      %s277 = scalar_lea.vmem %s2, %s276
      // Predicated region
      $region29: #{unet_forward.7} parent=27 // pred_check
        %p278 = pneg %p78
      $region30: #{unet_forward.7} parent=27 // pred_check_branch
        %280 = sbr.rel (%p278) target = $region32
      $region31: #{unet_forward.7} parent=27 // pred_region
        _
      $region32: #{unet_forward.7} parent=27 // pred_fallthru
        _
    $region28: #{unet_forward.7} parent=5 // pred_fallthru
      _
    %p281 = scmp.le.s32.totalorder 2, %s8
    // Predicated region
    $region33: #{unet_forward.7} parent=5 // pred_check
      %p282 = pneg %p281
    $region34: #{unet_forward.7} parent=5 // pred_check_branch
      %284 = sbr.rel (%p282) target = $region36
    $region35: #{unet_forward.7} parent=5 // pred_region
      %s285 = ssub.s32 %s8, 2
      // Predicated region
      $region37: #{unet_forward.7} parent=35 // pred_check
        %p286 = pneg %p84
      $region38: #{unet_forward.7} parent=35 // pred_check_branch
        %288 = sbr.rel (%p286) target = $region40
      $region39: #{unet_forward.7} parent=35 // pred_region
        %p289 = scmp.lt.s32.totalorder %s14, 1
        %s290 = scalar_select %p289, %s14, 1
        %s291 = smul.addr %s290, 2
        %s292 = smul.addr %s291, 8
        %s293 = scalar_lea.vmem %s2, %s292
      $region40: #{unet_forward.7} parent=35 // pred_fallthru
        _
    $region36: #{unet_forward.7} parent=5 // pred_fallthru
      _
  $region6: #{unet_forward.7} parent=0 // loop_footer
    %s12 = sadd.s32 1, %s8
  $region7: #{unet_forward.7} parent=0 // loop_footer_branch
    %7 = sbr.rel target = $region3
  $region8: #{unet_forward.7} parent=0 // loop_exit
    _

// kernel: unet_forward.8
$region0: #{unet_forward.8}
  #allocation0 [shape = 'u32[]', space=smem, size = 0x4, offset = 0x4, fixed_abs, tag = 'smem constant byte address 0x4 - core index']
  #allocation1 [shape = 'u32[144,128]{1,0:T(1,128)}', space=vmem, size = 0x12000, scoped, tag = 'internal scratch']
  %s0 = inlined_call_operand.vmem [shape: bf16[2,144,16], index: 0, kind: input, shape index: {}]
  %s1 = inlined_call_operand.vmem [shape: bf16[16,144], index: 1, kind: input, shape index: {}]
  %s2 = inlined_call_operand.vmem [shape: f32[2,16,16], index: 2, kind: output, shape index: {}]
  %s3 = sld [smem:[#allocation0]]
  $region41: #{unet_forward.8} parent=0
    _
  %s5 = ssub.s32 1, %s3
  %s6 = scalar_select 0, %s5, %s3
  loop: start=0, step=1, limit=4
  $region2: #{unet_forward.8} parent=0 // loop_pre_header
    _
  $region3: #{unet_forward.8} parent=0 // loop_header
    %s8 = sphi 0, %s12
    %p9 = scmp.ge.s32.totalorder %s8, 4
    %s18 = sphi 0, %s20
    %s21 = sphi 0, %s18
    %s22 = sphi 0, %s21
    %s38 = sphi 0, %s22
    %s42 = sphi 0, %s42
    %s44 = sphi 0, %s42
    %s45 = sphi 0, %s44
    %s59 = sphi 0, %s45
    %s65 = sphi 0, %s67
    %s68 = sphi 0, %s65
    %s69 = sphi 0, %s68
    %s85 = sphi 0, %s69
  $region4: #{unet_forward.8} parent=0 // loop_header_branch
    %11 = sbr.rel (%p9) target = $region8
  $region5: #{unet_forward.8} parent=0 // loop_body
    %s13 = ssub.s32 %s8, 1
    %s14 = ssub.s32 %s8, 2
    %s15 = sadd.s32 %s8, 1
    %s16 = ssub.s32 %s8, %s15
    %p17 = scmp.eq.s32.totalorder %s16, 0
    %s19 = sadd.s32 %s18, 1
    %s20 = scalar_select %p17, %s18, %s19
    %p23 = pneg %p17
    %p24 = scmp.eq.s32.totalorder %s8, 1
    %p25 = por %p23, %p24
    %p26 = scmp.ne.s32.totalorder %s18, %s21
    %p27 = scmp.eq.s32.totalorder %s8, 0
    %p28 = por %p26, %p27
    %p29 = scmp.ne.s32.totalorder %s18, %s21
    %p30 = scmp.eq.s32.totalorder %s13, 1
    %p31 = por %p29, %p30
    %p32 = scmp.ne.s32.totalorder %s21, %s22
    %p33 = scmp.eq.s32.totalorder %s13, 0
    %p34 = por %p32, %p33
    %p35 = scmp.ne.s32.totalorder %s21, %s22
    %p36 = scmp.eq.s32.totalorder %s14, 1
    %p37 = por %p35, %p36
    %p39 = scmp.ne.s32.totalorder %s22, %s38
    %p40 = scmp.eq.s32.totalorder %s14, 0
    %p41 = por %p39, %p40
    %s43 = sadd.s32 %s42, 1
    %p46 = scmp.eq.s32.totalorder %s8, 1
    %p47 = scmp.ne.s32.totalorder %s42, %s44
    %p48 = scmp.eq.s32.totalorder %s8, 0
    %p49 = por %p47, %p48
    %p50 = scmp.ne.s32.totalorder %s42, %s44
    %p51 = scmp.eq.s32.totalorder %s13, 1
    %p52 = por %p50, %p51
    %p53 = scmp.ne.s32.totalorder %s44, %s45
    %p54 = scmp.eq.s32.totalorder %s13, 0
    %p55 = por %p53, %p54
    %p56 = scmp.ne.s32.totalorder %s44, %s45
    %p57 = scmp.eq.s32.totalorder %s14, 1
    %p58 = por %p56, %p57
    %p60 = scmp.ne.s32.totalorder %s45, %s59
    %p61 = scmp.eq.s32.totalorder %s14, 0
    %p62 = por %p60, %p61
    %s63 = ssub.s32 %s8, %s15
    %p64 = scmp.eq.s32.totalorder %s63, 0
    %s66 = sadd.s32 %s65, 1
    %s67 = scalar_select %p64, %s65, %s66
    %p70 = pneg %p64
    %p71 = scmp.eq.s32.totalorder %s8, 1
    %p72 = por %p70, %p71
    %p73 = scmp.ne.s32.totalorder %s65, %s68
    %p74 = scmp.eq.s32.totalorder %s8, 0
    %p75 = por %p73, %p74
    %p76 = scmp.ne.s32.totalorder %s65, %s68
    %p77 = scmp.eq.s32.totalorder %s13, 1
    %p78 = por %p76, %p77
    %p79 = scmp.ne.s32.totalorder %s68, %s69
    %p80 = scmp.eq.s32.totalorder %s13, 0
    %p81 = por %p79, %p80
    %p82 = scmp.ne.s32.totalorder %s68, %s69
    %p83 = scmp.eq.s32.totalorder %s14, 1
    %p84 = por %p82, %p83
    %p86 = scmp.ne.s32.totalorder %s69, %s85
    %p87 = scmp.eq.s32.totalorder %s14, 0
    %p88 = por %p86, %p87
    %p89 = scmp.le.s32.totalorder 1, %s8
    %p90 = scmp.lt.s32.totalorder %s8, 3
    %p91 = pnand %p89, %p90
    %p92 = pneg %p91
    // Predicated region
    $region9: #{unet_forward.8} parent=5 // pred_check
      _
    $region10: #{unet_forward.8} parent=5 // pred_check_branch
      %94 = sbr.rel (%p91) target = $region12
    $region11: #{unet_forward.8} parent=5 // pred_region
      %s95 = ssub.s32 %s8, 1
      // Predicated region
      $region13: #{unet_forward.8} parent=11 // pred_check
        %p96 = pneg %p55
      $region14: #{unet_forward.8} parent=11 // pred_check_branch
        %98 = sbr.rel (%p96) target = $region16
      $region15: #{unet_forward.8} parent=11 // pred_region
        _
      $region16: #{unet_forward.8} parent=11 // pred_fallthru
        _
    $region12: #{unet_forward.8} parent=5 // pred_fallthru
      _
    %p99 = scmp.lt.s32.totalorder %s8, 2
    // Predicated region
    $region17: #{unet_forward.8} parent=5 // pred_check
      %p100 = pneg %p99
    $region18: #{unet_forward.8} parent=5 // pred_check_branch
      %102 = sbr.rel (%p100) target = $region20
    $region19: #{unet_forward.8} parent=5 // pred_region
      // Predicated region
      $region21: #{unet_forward.8} parent=19 // pred_check
        %p103 = pneg %p28
      $region22: #{unet_forward.8} parent=19 // pred_check_branch
        %105 = sbr.rel (%p103) target = $region24
      $region23: #{unet_forward.8} parent=19 // pred_region
        %p106 = scmp.lt.s32.totalorder %s8, 1
        %s107 = scalar_select %p106, %s8, 1
        %s108 = smul.addr %s107, 18
        %s109 = smul.addr %s108, 4
        %s110 = scalar_lea.vmem %s0, %s109
      $region24: #{unet_forward.8} parent=19 // pred_fallthru
        _
    $region20: #{unet_forward.8} parent=5 // pred_fallthru
      _
    %p111 = scmp.le.s32.totalorder 1, %s8
    %p112 = scmp.lt.s32.totalorder %s8, 3
    %p113 = pnand %p111, %p112
    %p114 = pneg %p113
    // Predicated region
    $region25: #{unet_forward.8} parent=5 // pred_check
      _
    $region26: #{unet_forward.8} parent=5 // pred_check_branch
      %116 = sbr.rel (%p113) target = $region28
    $region27: #{unet_forward.8} parent=5 // pred_region
      %s117 = ssub.s32 %s8, 1
      %p118 = scmp.lt.s32.totalorder %s13, 1
      %s119 = scalar_select %p118, %s13, 1
      %s120 = smul.addr %s119, 18
      %s121 = smul.addr %s120, 4
      %s122 = scalar_lea.vmem %s0, %s121
      %p123 = pneg %p34
      %p124 = pneg %p31
      %p125 = pneg %p55
      %p126 = pneg %p52
      %p127 = pneg %p81
      %p128 = pneg %p78
      %p129 = scmp.lt.s32.totalorder %s13, 1
      %s130 = scalar_select %p129, %s13, 1
      %s131 = smul.addr %s130, 2
      %s132 = smul.addr %s131, 8
      %s133 = scalar_lea.vmem %s2, %s132
      %p134 = scmp.lt.s32.totalorder %s13, 1
      %s135 = scalar_select %p134, %s13, 1
      %s136 = smul.addr %s135, 18
      %s137 = smul.addr %s136, 4
      %s138 = scalar_lea.vmem %s0, %s137
      %p139 = scmp.lt.s32.totalorder %s13, 1
      %s140 = scalar_select %p139, %s13, 1
      %s141 = smul.addr %s140, 2
      %s142 = smul.addr %s141, 8
      %s143 = scalar_lea.vmem %s2, %s142
      %v145 = vld [vmem:[%s1] sm:$0xff]
      %v146 = vld [vmem:[%s1 + $0x8] sm:$0xff]
      %v147 = vld [vmem:[%s138] sm:$0xf]
      %v148 = vld [vmem:[%s138 + $0x4] sm:$0xf]
      %v149 = vld [vmem:[%s138 + $0x8] sm:$0xf]
      %v150 = vld [vmem:[%s138 + $0xc] sm:$0xf]
      %v151 = vld [vmem:[%s138 + $0x10] sm:$0xf]
      %v152 = vld [vmem:[%s138 + $0x14] sm:$0xf]
      %v153 = vld [vmem:[%s138 + $0x18] sm:$0xf]
      %v154 = vld [vmem:[%s138 + $0x1c] sm:$0xf]
      %v155 = vld [vmem:[%s138 + $0x20] sm:$0xf]
      %v156 = vld [vmem:[%s138 + $0x24] sm:$0xf]
      %v157 = vld [vmem:[%s138 + $0x28] sm:$0xf]
      %v158 = vld [vmem:[%s138 + $0x2c] sm:$0xf]
      %v159 = vld [vmem:[%s138 + $0x30] sm:$0xf]
      %v160 = vld [vmem:[%s138 + $0x34] sm:$0xf]
      %v161 = vld [vmem:[%s138 + $0x38] sm:$0xf]
      %v162 = vld [vmem:[%s138 + $0x3c] sm:$0xf]
      %v163 = vld [vmem:[%s138 + $0x40] sm:$0xf]
      %v164 = vld [vmem:[%s138 + $0x44] sm:$0xf]
      %v167 = vunpack.c.l.b16 %v145
      %v168 = vunpack.c.h.b16 %v145
      %v169 = vunpack.c.l.b16 %v146
      %v170 = vunpack.c.h.b16 %v146
      %v171 = vpack.c.b16 %v169, %v167
      %v172 = vpack.c.b16 %v170, %v168
      %v192 = vunpack.c.l.b16 %v147
      %v193 = vunpack.c.l.b16 %v148
      %v194 = vunpack.c.l.b16 %v149
      %v195 = vunpack.c.l.b16 %v150
      %v196 = vunpack.c.l.b16 %v151
      %v197 = vunpack.c.l.b16 %v152
      %v198 = vunpack.c.l.b16 %v153
      %v199 = vunpack.c.l.b16 %v154
      %v200 = vunpack.c.l.b16 %v155
      %v201 = vunpack.c.l.b16 %v156
      %v202 = vunpack.c.l.b16 %v157
      %v203 = vunpack.c.l.b16 %v158
      %v204 = vunpack.c.l.b16 %v159
      %v205 = vunpack.c.l.b16 %v160
      %v206 = vunpack.c.l.b16 %v161
      %v207 = vunpack.c.l.b16 %v162
      %v208 = vunpack.c.l.b16 %v163
      %v209 = vunpack.c.l.b16 %v164
      %v210 = vpack.c.b16 %v193, %v192
      %v211 = vpack.c.b16 %v195, %v194
      %v212 = vpack.c.b16 %v197, %v196
      %v213 = vpack.c.b16 %v199, %v198
      %v214 = vpack.c.b16 %v201, %v200
      %v215 = vpack.c.b16 %v203, %v202
      %v216 = vpack.c.b16 %v205, %v204
      %v217 = vpack.c.b16 %v207, %v206
      %v218 = vpack.c.b16 %v209, %v208
      %vm228 = vcmask 130048
      %v230 = vsel %vm228, %v172, 0
      %232 = vmatprep.subr.bf16.mxu0 0
      %233 = vmatpush1.bf16.msra.mxu0 %v217
      %234 = vmatprep.subr.bf16.mxu0 0
      %235 = vmatpush1.bf16.msra.mxu0 %v216
      %236 = vmatprep.subr.bf16.mxu0 0
      %237 = vmatpush1.bf16.msra.mxu0 %v215
      %238 = vmatprep.subr.bf16.mxu0 0
      %239 = vmatpush1.bf16.msra.mxu0 %v214
      %240 = vmatprep.subr.bf16.mxu0 0
      %241 = vmatpush1.bf16.msra.mxu0 %v213
      %242 = vmatprep.subr.bf16.mxu0 0
      %243 = vmatpush1.bf16.msra.mxu0 %v212
      %244 = vmatprep.subr.bf16.mxu0 0
      %245 = vmatpush1.bf16.msra.mxu0 %v211
      %246 = vmatprep.subr.bf16.mxu0 0
      %247 = vmatpush1.bf16.msra.mxu0 %v210
      %248 = vmatprep.subr.bf16.mxu0 0
      %249 = vmatpush2.bf16.msra.mxu0 0
      %250 = vmatprep.subr.bf16.mxu0 0
      %251 = vmatpush2.bf16.msra.mxu0 0
      %252 = vmatprep.subr.bf16.mxu0 0
      %253 = vmatpush2.bf16.msra.mxu0 0
      %254 = vmatprep.subr.bf16.mxu0 0
      %255 = vmatpush2.bf16.msra.mxu0 0
      %256 = vmatprep.subr.bf16.mxu0 0
      %257 = vmatpush2.bf16.msra.mxu0 0
      %258 = vmatprep.subr.bf16.mxu0 0
      %259 = vmatpush2.bf16.msra.mxu0 0
      %260 = vmatprep.subr.bf16.mxu0 0
      %261 = vmatpush2.bf16.msra.mxu0 0
      %262 = vmatprep.subr.bf16.mxu0 0
      %263 = vmatpush2.bf16.msra.mxu0 %v218
      %264 = vmatprep.mubr.bf16.mxu0 %v230
      %265 = vmatmul.mubr.bf16.gmra.mxu0 %v171
      %v266 = vpop.f32.mrf.mxu0
      %v267 = vadd.f32 0.0, %v266
      %v268 = vpop.f32.mrf.mxu0
      %v269 = vpop.f32.mrf.mxu0
      %v270 = vadd.f32 0.0, %v269
      %v271 = vpop.f32.mrf.mxu0
      %272 = vdwg.mxu0
      %v273 = vsel %vm228, %v267, 0.0
      %274 = vadd.xlane.f32.xlu0 %v273
      %v275 = vpop.xlane.xlu0 %274
      %v276 = vsel %vm228, %v270, 0.0
      %277 = vadd.xlane.f32.xlu0 %v276
      %v278 = vpop.xlane.xlu0 %277
      %v279 = vrcp.pop 16.0
      %v280 = vmul.f32 %v275, %v279
      %v281 = vmul.f32 %v278, %v279
      %v282 = vmul.f32 %v267, %v267
      %v283 = vmul.f32 %v270, %v270
      %v284 = vsel %vm228, %v282, 0.0
      %285 = vadd.xlane.f32.xlu0 %v284
      %v286 = vpop.xlane.xlu0 %285
      %v287 = vsel %vm228, %v283, 0.0
      %288 = vadd.xlane.f32.xlu0 %v287
      %v289 = vpop.xlane.xlu0 %288
      %v290 = vmul.f32 %v286, %v279
      %v291 = vmul.f32 %v289, %v279
      %v292 = vmul.f32 %v280, %v280
      %v293 = vmul.f32 %v281, %v281
      %v294 = vsub.f32 %v290, %v292
      %v295 = vsub.f32 %v291, %v293
      %v296 = vsub.f32 %v267, %v280
      %v297 = vsub.f32 %v270, %v281
      %v298 = vadd.f32 %v294, 1e-05
      %v299 = vadd.f32 %v295, 1e-05
      %v300 = vrsqrt.pop %v298
      %v301 = vrsqrt.pop %v299
      %v302 = vmul.f32 %v296, %v300
      %v303 = vmul.f32 %v297, %v301
      %v304 = vmax.f32 %v302, 0.0
      %v305 = vmax.f32 %v303, 0.0
      %306 = vst.msk [vmem:[%s143] sm:$0xff] %vm228, %v304
      %307 = vst.msk [vmem:[%s143 + $0x8] sm:$0xff] %vm228, %v305
      %p308 = scmp.lt.s32.totalorder %s13, 1
      %s309 = scalar_select %p308, %s13, 1
      %s310 = smul.addr %s309, 2
      %s311 = smul.addr %s310, 8
      %s312 = scalar_lea.vmem %s2, %s311
      // Predicated region
      $region29: #{unet_forward.8} parent=27 // pred_check
        %p313 = pneg %p78
      $region30: #{unet_forward.8} parent=27 // pred_check_branch
        %315 = sbr.rel (%p313) target = $region32
      $region31: #{unet_forward.8} parent=27 // pred_region
        _
      $region32: #{unet_forward.8} parent=27 // pred_fallthru
        _
    $region28: #{unet_forward.8} parent=5 // pred_fallthru
      _
    %p316 = scmp.le.s32.totalorder 2, %s8
    // Predicated region
    $region33: #{unet_forward.8} parent=5 // pred_check
      %p317 = pneg %p316
    $region34: #{unet_forward.8} parent=5 // pred_check_branch
      %319 = sbr.rel (%p317) target = $region36
    $region35: #{unet_forward.8} parent=5 // pred_region
      %s320 = ssub.s32 %s8, 2
      // Predicated region
      $region37: #{unet_forward.8} parent=35 // pred_check
        %p321 = pneg %p84
      $region38: #{unet_forward.8} parent=35 // pred_check_branch
        %323 = sbr.rel (%p321) target = $region40
      $region39: #{unet_forward.8} parent=35 // pred_region
        %p324 = scmp.lt.s32.totalorder %s14, 1
        %s325 = scalar_select %p324, %s14, 1
        %s326 = smul.addr %s325, 2
        %s327 = smul.addr %s326, 8
        %s328 = scalar_lea.vmem %s2, %s327
      $region40: #{unet_forward.8} parent=35 // pred_fallthru
        _
    $region36: #{unet_forward.8} parent=5 // pred_fallthru
      _
  $region6: #{unet_forward.8} parent=0 // loop_footer
    %s12 = sadd.s32 1, %s8
  $region7: #{unet_forward.8} parent=0 // loop_footer_branch
    %7 = sbr.rel target = $region3
  $region8: #{unet_forward.8} parent=0 // loop_exit
    _

// kernel: unet_forward.9
$region0: #{unet_forward.9}
  #allocation0 [shape = 'u32[]', space=smem, size = 0x4, offset = 0x4, fixed_abs, tag = 'smem constant byte address 0x4 - core index']
  #allocation1 [shape = 'u32[144,128]{1,0:T(1,128)}', space=vmem, size = 0x12000, scoped, tag = 'internal scratch']
  %s0 = inlined_call_operand.vmem [shape: bf16[2,288,64], index: 0, kind: input, shape index: {}]
  %s1 = inlined_call_operand.vmem [shape: bf16[8,288], index: 1, kind: input, shape index: {}]
  %s2 = inlined_call_operand.vmem [shape: f32[2,8,64], index: 2, kind: output, shape index: {}]
  %s3 = sld [smem:[#allocation0]]
  $region41: #{unet_forward.9} parent=0
    _
  %s5 = ssub.s32 1, %s3
  %s6 = scalar_select 0, %s5, %s3
  loop: start=0, step=1, limit=4
  $region2: #{unet_forward.9} parent=0 // loop_pre_header
    _
  $region3: #{unet_forward.9} parent=0 // loop_header
    %s8 = sphi 0, %s12
    %p9 = scmp.ge.s32.totalorder %s8, 4
    %s18 = sphi 0, %s20
    %s21 = sphi 0, %s18
    %s22 = sphi 0, %s21
    %s38 = sphi 0, %s22
    %s42 = sphi 0, %s42
    %s44 = sphi 0, %s42
    %s45 = sphi 0, %s44
    %s59 = sphi 0, %s45
    %s65 = sphi 0, %s67
    %s68 = sphi 0, %s65
    %s69 = sphi 0, %s68
    %s85 = sphi 0, %s69
  $region4: #{unet_forward.9} parent=0 // loop_header_branch
    %11 = sbr.rel (%p9) target = $region8
  $region5: #{unet_forward.9} parent=0 // loop_body
    %s13 = ssub.s32 %s8, 1
    %s14 = ssub.s32 %s8, 2
    %s15 = sadd.s32 %s8, 1
    %s16 = ssub.s32 %s8, %s15
    %p17 = scmp.eq.s32.totalorder %s16, 0
    %s19 = sadd.s32 %s18, 1
    %s20 = scalar_select %p17, %s18, %s19
    %p23 = pneg %p17
    %p24 = scmp.eq.s32.totalorder %s8, 1
    %p25 = por %p23, %p24
    %p26 = scmp.ne.s32.totalorder %s18, %s21
    %p27 = scmp.eq.s32.totalorder %s8, 0
    %p28 = por %p26, %p27
    %p29 = scmp.ne.s32.totalorder %s18, %s21
    %p30 = scmp.eq.s32.totalorder %s13, 1
    %p31 = por %p29, %p30
    %p32 = scmp.ne.s32.totalorder %s21, %s22
    %p33 = scmp.eq.s32.totalorder %s13, 0
    %p34 = por %p32, %p33
    %p35 = scmp.ne.s32.totalorder %s21, %s22
    %p36 = scmp.eq.s32.totalorder %s14, 1
    %p37 = por %p35, %p36
    %p39 = scmp.ne.s32.totalorder %s22, %s38
    %p40 = scmp.eq.s32.totalorder %s14, 0
    %p41 = por %p39, %p40
    %s43 = sadd.s32 %s42, 1
    %p46 = scmp.eq.s32.totalorder %s8, 1
    %p47 = scmp.ne.s32.totalorder %s42, %s44
    %p48 = scmp.eq.s32.totalorder %s8, 0
    %p49 = por %p47, %p48
    %p50 = scmp.ne.s32.totalorder %s42, %s44
    %p51 = scmp.eq.s32.totalorder %s13, 1
    %p52 = por %p50, %p51
    %p53 = scmp.ne.s32.totalorder %s44, %s45
    %p54 = scmp.eq.s32.totalorder %s13, 0
    %p55 = por %p53, %p54
    %p56 = scmp.ne.s32.totalorder %s44, %s45
    %p57 = scmp.eq.s32.totalorder %s14, 1
    %p58 = por %p56, %p57
    %p60 = scmp.ne.s32.totalorder %s45, %s59
    %p61 = scmp.eq.s32.totalorder %s14, 0
    %p62 = por %p60, %p61
    %s63 = ssub.s32 %s8, %s15
    %p64 = scmp.eq.s32.totalorder %s63, 0
    %s66 = sadd.s32 %s65, 1
    %s67 = scalar_select %p64, %s65, %s66
    %p70 = pneg %p64
    %p71 = scmp.eq.s32.totalorder %s8, 1
    %p72 = por %p70, %p71
    %p73 = scmp.ne.s32.totalorder %s65, %s68
    %p74 = scmp.eq.s32.totalorder %s8, 0
    %p75 = por %p73, %p74
    %p76 = scmp.ne.s32.totalorder %s65, %s68
    %p77 = scmp.eq.s32.totalorder %s13, 1
    %p78 = por %p76, %p77
    %p79 = scmp.ne.s32.totalorder %s68, %s69
    %p80 = scmp.eq.s32.totalorder %s13, 0
    %p81 = por %p79, %p80
    %p82 = scmp.ne.s32.totalorder %s68, %s69
    %p83 = scmp.eq.s32.totalorder %s14, 1
    %p84 = por %p82, %p83
    %p86 = scmp.ne.s32.totalorder %s69, %s85
    %p87 = scmp.eq.s32.totalorder %s14, 0
    %p88 = por %p86, %p87
    %p89 = scmp.le.s32.totalorder 1, %s8
    %p90 = scmp.lt.s32.totalorder %s8, 3
    %p91 = pnand %p89, %p90
    %p92 = pneg %p91
    // Predicated region
    $region9: #{unet_forward.9} parent=5 // pred_check
      _
    $region10: #{unet_forward.9} parent=5 // pred_check_branch
      %94 = sbr.rel (%p91) target = $region12
    $region11: #{unet_forward.9} parent=5 // pred_region
      %s95 = ssub.s32 %s8, 1
      // Predicated region
      $region13: #{unet_forward.9} parent=11 // pred_check
        %p96 = pneg %p55
      $region14: #{unet_forward.9} parent=11 // pred_check_branch
        %98 = sbr.rel (%p96) target = $region16
      $region15: #{unet_forward.9} parent=11 // pred_region
        _
      $region16: #{unet_forward.9} parent=11 // pred_fallthru
        _
    $region12: #{unet_forward.9} parent=5 // pred_fallthru
      _
    %p99 = scmp.lt.s32.totalorder %s8, 2
    // Predicated region
    $region17: #{unet_forward.9} parent=5 // pred_check
      %p100 = pneg %p99
    $region18: #{unet_forward.9} parent=5 // pred_check_branch
      %102 = sbr.rel (%p100) target = $region20
    $region19: #{unet_forward.9} parent=5 // pred_region
      // Predicated region
      $region21: #{unet_forward.9} parent=19 // pred_check
        %p103 = pneg %p28
      $region22: #{unet_forward.9} parent=19 // pred_check_branch
        %105 = sbr.rel (%p103) target = $region24
      $region23: #{unet_forward.9} parent=19 // pred_region
        %p106 = scmp.lt.s32.totalorder %s8, 1
        %s107 = scalar_select %p106, %s8, 1
        %s108 = smul.addr %s107, 36
        %s109 = smul.addr %s108, 4
        %s110 = scalar_lea.vmem %s0, %s109
      $region24: #{unet_forward.9} parent=19 // pred_fallthru
        _
    $region20: #{unet_forward.9} parent=5 // pred_fallthru
      _
    %p111 = scmp.le.s32.totalorder 1, %s8
    %p112 = scmp.lt.s32.totalorder %s8, 3
    %p113 = pnand %p111, %p112
    %p114 = pneg %p113
    // Predicated region
    $region25: #{unet_forward.9} parent=5 // pred_check
      _
    $region26: #{unet_forward.9} parent=5 // pred_check_branch
      %116 = sbr.rel (%p113) target = $region28
    $region27: #{unet_forward.9} parent=5 // pred_region
      %s117 = ssub.s32 %s8, 1
      %p118 = scmp.lt.s32.totalorder %s13, 1
      %s119 = scalar_select %p118, %s13, 1
      %s120 = smul.addr %s119, 36
      %s121 = smul.addr %s120, 4
      %s122 = scalar_lea.vmem %s0, %s121
      %p123 = pneg %p34
      %p124 = pneg %p31
      %p125 = pneg %p55
      %p126 = pneg %p52
      %p127 = pneg %p81
      %p128 = pneg %p78
      %p129 = scmp.lt.s32.totalorder %s13, 1
      %s130 = scalar_select %p129, %s13, 1
      %s131 = smul.addr %s130, 8
      %s132 = scalar_lea.vmem %s2, %s131
      %p133 = scmp.lt.s32.totalorder %s13, 1
      %s134 = scalar_select %p133, %s13, 1
      %s135 = smul.addr %s134, 36
      %s136 = smul.addr %s135, 4
      %s137 = scalar_lea.vmem %s0, %s136
      %p138 = scmp.lt.s32.totalorder %s13, 1
      %s139 = scalar_select %p138, %s13, 1
      %s140 = smul.addr %s139, 8
      %s141 = scalar_lea.vmem %s2, %s140
      %v143 = vld [vmem:[%s1] sm:$0xff]
      %v144 = vld [vmem:[%s1 + $0x8] sm:$0xf]
      %v145 = vld [vmem:[%s137] sm:$0xf]
      %v146 = vld [vmem:[%s137 + $0x4] sm:$0xf]
      %v147 = vld [vmem:[%s137 + $0x8] sm:$0xf]
      %v148 = vld [vmem:[%s137 + $0xc] sm:$0xf]
      %v149 = vld [vmem:[%s137 + $0x10] sm:$0xf]
      %v150 = vld [vmem:[%s137 + $0x14] sm:$0xf]
      %v151 = vld [vmem:[%s137 + $0x18] sm:$0xf]
      %v152 = vld [vmem:[%s137 + $0x1c] sm:$0xf]
      %v153 = vld [vmem:[%s137 + $0x20] sm:$0xf]
      %v154 = vld [vmem:[%s137 + $0x24] sm:$0xf]
      %v155 = vld [vmem:[%s137 + $0x28] sm:$0xf]
      %v156 = vld [vmem:[%s137 + $0x2c] sm:$0xf]
      %v157 = vld [vmem:[%s137 + $0x30] sm:$0xf]
      %v158 = vld [vmem:[%s137 + $0x34] sm:$0xf]
      %v159 = vld [vmem:[%s137 + $0x38] sm:$0xf]
      %v160 = vld [vmem:[%s137 + $0x3c] sm:$0xf]
      %v161 = vld [vmem:[%s137 + $0x40] sm:$0xf]
      %v162 = vld [vmem:[%s137 + $0x44] sm:$0xf]
      %v163 = vld [vmem:[%s137 + $0x48] sm:$0xf]
      %v164 = vld [vmem:[%s137 + $0x4c] sm:$0xf]
      %v165 = vld [vmem:[%s137 + $0x50] sm:$0xf]
      %v166 = vld [vmem:[%s137 + $0x54] sm:$0xf]
      %v167 = vld [vmem:[%s137 + $0x58] sm:$0xf]
      %v168 = vld [vmem:[%s137 + $0x5c] sm:$0xf]
      %v169 = vld [vmem:[%s137 + $0x60] sm:$0xf]
      %v170 = vld [vmem:[%s137 + $0x64] sm:$0xf]
      %v171 = vld [vmem:[%s137 + $0x68] sm:$0xf]
      %v172 = vld [vmem:[%s137 + $0x6c] sm:$0xf]
      %v173 = vld [vmem:[%s137 + $0x70] sm:$0xf]
      %v174 = vld [vmem:[%s137 + $0x74] sm:$0xf]
      %v175 = vld [vmem:[%s137 + $0x78] sm:$0xf]
      %v176 = vld [vmem:[%s137 + $0x7c] sm:$0xf]
      %v177 = vld [vmem:[%s137 + $0x80] sm:$0xf]
      %v178 = vld [vmem:[%s137 + $0x84] sm:$0xf]
      %v179 = vld [vmem:[%s137 + $0x88] sm:$0xf]
      %v180 = vld [vmem:[%s137 + $0x8c] sm:$0xf]
      %v183 = vunpack.c.l.b16 %v143
      %v184 = vunpack.c.h.b16 %v143
      %v185 = vunpack.c.l.b16 %v144
      %v186 = vpack.c.b16 %v183, %v183
      %v187 = vpack.c.b16 %v184, %v184
      %v188 = vpack.c.b16 %v185, %v185
      %v227 = vunpack.c.l.b16 %v145
      %v228 = vunpack.c.l.b16 %v146
      %v229 = vunpack.c.l.b16 %v147
      %v230 = vunpack.c.l.b16 %v148
      %v231 = vunpack.c.l.b16 %v149
      %v232 = vunpack.c.l.b16 %v150
      %v233 = vunpack.c.l.b16 %v151
      %v234 = vunpack.c.l.b16 %v152
      %v235 = vunpack.c.l.b16 %v153
      %v236 = vunpack.c.l.b16 %v154
      %v237 = vunpack.c.l.b16 %v155
      %v238 = vunpack.c.l.b16 %v156
      %v239 = vunpack.c.l.b16 %v157
      %v240 = vunpack.c.l.b16 %v158
      %v241 = vunpack.c.l.b16 %v159
      %v242 = vunpack.c.l.b16 %v160
      %v243 = vunpack.c.l.b16 %v161
      %v244 = vunpack.c.l.b16 %v162
      %v245 = vunpack.c.l.b16 %v163
      %v246 = vunpack.c.l.b16 %v164
      %v247 = vunpack.c.l.b16 %v165
      %v248 = vunpack.c.l.b16 %v166
      %v249 = vunpack.c.l.b16 %v167
      %v250 = vunpack.c.l.b16 %v168
      %v251 = vunpack.c.l.b16 %v169
      %v252 = vunpack.c.l.b16 %v170
      %v253 = vunpack.c.l.b16 %v171
      %v254 = vunpack.c.l.b16 %v172
      %v255 = vunpack.c.l.b16 %v173
      %v256 = vunpack.c.l.b16 %v174
      %v257 = vunpack.c.l.b16 %v175
      %v258 = vunpack.c.l.b16 %v176
      %v259 = vunpack.c.l.b16 %v177
      %v260 = vunpack.c.l.b16 %v178
      %v261 = vunpack.c.l.b16 %v179
      %v262 = vunpack.c.l.b16 %v180
      %v263 = vpack.c.b16 %v228, %v227
      %v264 = vpack.c.b16 %v230, %v229
      %v265 = vpack.c.b16 %v232, %v231
      %v266 = vpack.c.b16 %v234, %v233
      %v267 = vpack.c.b16 %v236, %v235
      %v268 = vpack.c.b16 %v238, %v237
      %v269 = vpack.c.b16 %v240, %v239
      %v270 = vpack.c.b16 %v242, %v241
      %v271 = vpack.c.b16 %v244, %v243
      %v272 = vpack.c.b16 %v246, %v245
      %v273 = vpack.c.b16 %v248, %v247
      %v274 = vpack.c.b16 %v250, %v249
      %v275 = vpack.c.b16 %v252, %v251
      %v276 = vpack.c.b16 %v254, %v253
      %v277 = vpack.c.b16 %v256, %v255
      %v278 = vpack.c.b16 %v258, %v257
      %v279 = vpack.c.b16 %v260, %v259
      %v280 = vpack.c.b16 %v262, %v261
      %vm299 = vcmask 261120
      %v301 = vsel %vm299, %v188, 0
      %303 = vmatprep.subr.bf16.mxu0 0
      %304 = vmatpush1.bf16.msra.mxu0 %v270
      %305 = vmatprep.subr.bf16.mxu0 0
      %306 = vmatpush1.bf16.msra.mxu0 %v269
      %307 = vmatprep.subr.bf16.mxu0 0
      %308 = vmatpush1.bf16.msra.mxu0 %v268
      %309 = vmatprep.subr.bf16.mxu0 0
      %310 = vmatpush1.bf16.msra.mxu0 %v267
      %311 = vmatprep.subr.bf16.mxu0 0
      %312 = vmatpush1.bf16.msra.mxu0 %v266
      %313 = vmatprep.subr.bf16.mxu0 0
      %314 = vmatpush1.bf16.msra.mxu0 %v265
      %315 = vmatprep.subr.bf16.mxu0 0
      %316 = vmatpush1.bf16.msra.mxu0 %v264
      %317 = vmatprep.subr.bf16.mxu0 0
      %318 = vmatpush1.bf16.msra.mxu0 %v263
      %319 = vmatprep.subr.bf16.mxu0 0
      %320 = vmatpush2.bf16.msra.mxu0 %v278
      %321 = vmatprep.subr.bf16.mxu0 0
      %322 = vmatpush2.bf16.msra.mxu0 %v277
      %323 = vmatprep.subr.bf16.mxu0 0
      %324 = vmatpush2.bf16.msra.mxu0 %v276
      %325 = vmatprep.subr.bf16.mxu0 0
      %326 = vmatpush2.bf16.msra.mxu0 %v275
      %327 = vmatprep.subr.bf16.mxu0 0
      %328 = vmatpush2.bf16.msra.mxu0 %v274
      %329 = vmatprep.subr.bf16.mxu0 0
      %330 = vmatpush2.bf16.msra.mxu0 %v273
      %331 = vmatprep.subr.bf16.mxu0 0
      %332 = vmatpush2.bf16.msra.mxu0 %v272
      %333 = vmatprep.subr.bf16.mxu0 0
      %334 = vmatpush2.bf16.msra.mxu0 %v271
      %335 = vmatprep.mubr.bf16.mxu0 %v187
      %336 = vmatmul.mubr.bf16.gmra.mxu0 %v186
      %v337 = vpop.f32.mrf.mxu0
      %v338 = vadd.f32 0.0, %v337
      %v339 = vpop.f32.mrf.mxu0
      %v340 = vpop.f32.mrf.mxu0
      %v341 = vpop.f32.mrf.mxu0
      %342 = vdwg.mxu0
      %343 = vmatprep.subr.bf16.mxu0 0
      %344 = vmatpush1.bf16.msra.mxu0 0
      %345 = vmatprep.subr.bf16.mxu0 0
      %346 = vmatpush1.bf16.msra.mxu0 0
      %347 = vmatprep.subr.bf16.mxu0 0
      %348 = vmatpush1.bf16.msra.mxu0 0
      %349 = vmatprep.subr.bf16.mxu0 0
      %350 = vmatpush1.bf16.msra.mxu0 0
      %351 = vmatprep.subr.bf16.mxu0 0
      %352 = vmatpush1.bf16.msra.mxu0 0
      %353 = vmatprep.subr.bf16.mxu0 0
      %354 = vmatpush1.bf16.msra.mxu0 0
      %355 = vmatprep.subr.bf16.mxu0 0
      %356 = vmatpush1.bf16.msra.mxu0 %v280
      %357 = vmatprep.subr.bf16.mxu0 0
      %358 = vmatpush1.bf16.msra.mxu0 %v279
      %359 = vmatprep.subr.bf16.mxu0 0
      %360 = vmatpush2.bf16.msra.mxu0 0
      %361 = vmatprep.subr.bf16.mxu0 0
      %362 = vmatpush2.bf16.msra.mxu0 0
      %363 = vmatprep.subr.bf16.mxu0 0
      %364 = vmatpush2.bf16.msra.mxu0 0
      %365 = vmatprep.subr.bf16.mxu0 0
      %366 = vmatpush2.bf16.msra.mxu0 0
      %367 = vmatprep.subr.bf16.mxu0 0
      %368 = vmatpush2.bf16.msra.mxu0 0
      %369 = vmatprep.subr.bf16.mxu0 0
      %370 = vmatpush2.bf16.msra.mxu0 0
      %371 = vmatprep.subr.bf16.mxu0 0
      %372 = vmatpush2.bf16.msra.mxu0 0
      %373 = vmatprep.subr.bf16.mxu0 0
      %374 = vmatpush2.bf16.msra.mxu0 0
      %375 = vmatprep.mubr.bf16.mxu0 0
      %376 = vmatmul.mubr.bf16.gmra.mxu0 %v301
      %v377 = vpop.f32.mrf.mxu0
      %v378 = vadd.f32 %v338, %v377
      %v379 = vpop.f32.mrf.mxu0
      %v380 = vpop.f32.mrf.mxu0
      %v381 = vpop.f32.mrf.mxu0
      %382 = vdwg.mxu0
      %vm383 = vcmask 523264
      %v384 = vsel %vm383, %v378, 0.0
      %385 = vadd.xlane.f32.xlu0 %v384
      %v386 = vpop.xlane.xlu0 %385
      %v387 = vrcp.pop 64.0
      %v388 = vmul.f32 %v386, %v387
      %v389 = vmul.f32 %v378, %v378
      %v390 = vsel %vm383, %v389, 0.0
      %391 = vadd.xlane.f32.xlu0 %v390
      %v392 = vpop.xlane.xlu0 %391
      %v393 = vmul.f32 %v392, %v387
      %v394 = vmul.f32 %v388, %v388
      %v395 = vsub.f32 %v393, %v394
      %v396 = vsub.f32 %v378, %v388
      %v397 = vadd.f32 %v395, 1e-05
      %v398 = vrsqrt.pop %v397
      %v399 = vmul.f32 %v396, %v398
      %v400 = vmax.f32 %v399, 0.0
      %401 = vst.msk [vmem:[%s141] sm:$0xff] %vm383, %v400
      %p402 = scmp.lt.s32.totalorder %s13, 1
      %s403 = scalar_select %p402, %s13, 1
      %s404 = smul.addr %s403, 8
      %s405 = scalar_lea.vmem %s2, %s404
      // Predicated region
      $region29: #{unet_forward.9} parent=27 // pred_check
        %p406 = pneg %p78
      $region30: #{unet_forward.9} parent=27 // pred_check_branch
        %408 = sbr.rel (%p406) target = $region32
      $region31: #{unet_forward.9} parent=27 // pred_region
        _
      $region32: #{unet_forward.9} parent=27 // pred_fallthru
        _
    $region28: #{unet_forward.9} parent=5 // pred_fallthru
      _
    %p409 = scmp.le.s32.totalorder 2, %s8
    // Predicated region
    $region33: #{unet_forward.9} parent=5 // pred_check
      %p410 = pneg %p409
    $region34: #{unet_forward.9} parent=5 // pred_check_branch
      %412 = sbr.rel (%p410) target = $region36
    $region35: #{unet_forward.9} parent=5 // pred_region
      %s413 = ssub.s32 %s8, 2
      // Predicated region
      $region37: #{unet_forward.9} parent=35 // pred_check
        %p414 = pneg %p84
      $region38: #{unet_forward.9} parent=35 // pred_check_branch
        %416 = sbr.rel (%p414) target = $region40
      $region39: #{unet_forward.9} parent=35 // pred_region
        %p417 = scmp.lt.s32.totalorder %s14, 1
        %s418 = scalar_select %p417, %s14, 1
        %s419 = smul.addr %s418, 8
        %s420 = scalar_lea.vmem %s2, %s419
      $region40: #{unet_forward.9} parent=35 // pred_fallthru
        _
    $region36: #{unet_forward.9} parent=5 // pred_fallthru
      _
  $region6: #{unet_forward.9} parent=0 // loop_footer
    %s12 = sadd.s32 1, %s8
  $region7: #{unet_forward.9} parent=0 // loop_footer_branch
    %7 = sbr.rel target = $region3
  $region8: #{unet_forward.9} parent=0 // loop_exit
    _

// kernel: unet_forward.10
$region0: #{unet_forward.10}
  #allocation0 [shape = 'u32[]', space=smem, size = 0x4, offset = 0x4, fixed_abs, tag = 'smem constant byte address 0x4 - core index']
  #allocation1 [shape = 'u32[144,128]{1,0:T(1,128)}', space=vmem, size = 0x12000, scoped, tag = 'internal scratch']
  %s0 = inlined_call_operand.vmem [shape: bf16[2,144,256], index: 0, kind: input, shape index: {}]
  %s1 = inlined_call_operand.vmem [shape: bf16[8,144], index: 1, kind: input, shape index: {}]
  %s2 = inlined_call_operand.vmem [shape: f32[2,8,256], index: 2, kind: output, shape index: {}]
  %s3 = sld [smem:[#allocation0]]
  $region41: #{unet_forward.10} parent=0
    _
  %s5 = ssub.s32 1, %s3
  %s6 = scalar_select 0, %s5, %s3
  loop: start=0, step=1, limit=4
  $region2: #{unet_forward.10} parent=0 // loop_pre_header
    _
  $region3: #{unet_forward.10} parent=0 // loop_header
    %s8 = sphi 0, %s12
    %p9 = scmp.ge.s32.totalorder %s8, 4
    %s18 = sphi 0, %s20
    %s21 = sphi 0, %s18
    %s22 = sphi 0, %s21
    %s38 = sphi 0, %s22
    %s42 = sphi 0, %s42
    %s44 = sphi 0, %s42
    %s45 = sphi 0, %s44
    %s59 = sphi 0, %s45
    %s65 = sphi 0, %s67
    %s68 = sphi 0, %s65
    %s69 = sphi 0, %s68
    %s85 = sphi 0, %s69
  $region4: #{unet_forward.10} parent=0 // loop_header_branch
    %11 = sbr.rel (%p9) target = $region8
  $region5: #{unet_forward.10} parent=0 // loop_body
    %s13 = ssub.s32 %s8, 1
    %s14 = ssub.s32 %s8, 2
    %s15 = sadd.s32 %s8, 1
    %s16 = ssub.s32 %s8, %s15
    %p17 = scmp.eq.s32.totalorder %s16, 0
    %s19 = sadd.s32 %s18, 1
    %s20 = scalar_select %p17, %s18, %s19
    %p23 = pneg %p17
    %p24 = scmp.eq.s32.totalorder %s8, 1
    %p25 = por %p23, %p24
    %p26 = scmp.ne.s32.totalorder %s18, %s21
    %p27 = scmp.eq.s32.totalorder %s8, 0
    %p28 = por %p26, %p27
    %p29 = scmp.ne.s32.totalorder %s18, %s21
    %p30 = scmp.eq.s32.totalorder %s13, 1
    %p31 = por %p29, %p30
    %p32 = scmp.ne.s32.totalorder %s21, %s22
    %p33 = scmp.eq.s32.totalorder %s13, 0
    %p34 = por %p32, %p33
    %p35 = scmp.ne.s32.totalorder %s21, %s22
    %p36 = scmp.eq.s32.totalorder %s14, 1
    %p37 = por %p35, %p36
    %p39 = scmp.ne.s32.totalorder %s22, %s38
    %p40 = scmp.eq.s32.totalorder %s14, 0
    %p41 = por %p39, %p40
    %s43 = sadd.s32 %s42, 1
    %p46 = scmp.eq.s32.totalorder %s8, 1
    %p47 = scmp.ne.s32.totalorder %s42, %s44
    %p48 = scmp.eq.s32.totalorder %s8, 0
    %p49 = por %p47, %p48
    %p50 = scmp.ne.s32.totalorder %s42, %s44
    %p51 = scmp.eq.s32.totalorder %s13, 1
    %p52 = por %p50, %p51
    %p53 = scmp.ne.s32.totalorder %s44, %s45
    %p54 = scmp.eq.s32.totalorder %s13, 0
    %p55 = por %p53, %p54
    %p56 = scmp.ne.s32.totalorder %s44, %s45
    %p57 = scmp.eq.s32.totalorder %s14, 1
    %p58 = por %p56, %p57
    %p60 = scmp.ne.s32.totalorder %s45, %s59
    %p61 = scmp.eq.s32.totalorder %s14, 0
    %p62 = por %p60, %p61
    %s63 = ssub.s32 %s8, %s15
    %p64 = scmp.eq.s32.totalorder %s63, 0
    %s66 = sadd.s32 %s65, 1
    %s67 = scalar_select %p64, %s65, %s66
    %p70 = pneg %p64
    %p71 = scmp.eq.s32.totalorder %s8, 1
    %p72 = por %p70, %p71
    %p73 = scmp.ne.s32.totalorder %s65, %s68
    %p74 = scmp.eq.s32.totalorder %s8, 0
    %p75 = por %p73, %p74
    %p76 = scmp.ne.s32.totalorder %s65, %s68
    %p77 = scmp.eq.s32.totalorder %s13, 1
    %p78 = por %p76, %p77
    %p79 = scmp.ne.s32.totalorder %s68, %s69
    %p80 = scmp.eq.s32.totalorder %s13, 0
    %p81 = por %p79, %p80
    %p82 = scmp.ne.s32.totalorder %s68, %s69
    %p83 = scmp.eq.s32.totalorder %s14, 1
    %p84 = por %p82, %p83
    %p86 = scmp.ne.s32.totalorder %s69, %s85
    %p87 = scmp.eq.s32.totalorder %s14, 0
    %p88 = por %p86, %p87
    %p89 = scmp.le.s32.totalorder 1, %s8
    %p90 = scmp.lt.s32.totalorder %s8, 3
    %p91 = pnand %p89, %p90
    %p92 = pneg %p91
    // Predicated region
    $region9: #{unet_forward.10} parent=5 // pred_check
      _
    $region10: #{unet_forward.10} parent=5 // pred_check_branch
      %94 = sbr.rel (%p91) target = $region12
    $region11: #{unet_forward.10} parent=5 // pred_region
      %s95 = ssub.s32 %s8, 1
      // Predicated region
      $region13: #{unet_forward.10} parent=11 // pred_check
        %p96 = pneg %p55
      $region14: #{unet_forward.10} parent=11 // pred_check_branch
        %98 = sbr.rel (%p96) target = $region16
      $region15: #{unet_forward.10} parent=11 // pred_region
        _
      $region16: #{unet_forward.10} parent=11 // pred_fallthru
        _
    $region12: #{unet_forward.10} parent=5 // pred_fallthru
      _
    %p99 = scmp.lt.s32.totalorder %s8, 2
    // Predicated region
    $region17: #{unet_forward.10} parent=5 // pred_check
      %p100 = pneg %p99
    $region18: #{unet_forward.10} parent=5 // pred_check_branch
      %102 = sbr.rel (%p100) target = $region20
    $region19: #{unet_forward.10} parent=5 // pred_region
      // Predicated region
      $region21: #{unet_forward.10} parent=19 // pred_check
        %p103 = pneg %p28
      $region22: #{unet_forward.10} parent=19 // pred_check_branch
        %105 = sbr.rel (%p103) target = $region24
      $region23: #{unet_forward.10} parent=19 // pred_region
        %p106 = scmp.lt.s32.totalorder %s8, 1
        %s107 = scalar_select %p106, %s8, 1
        %s108 = smul.addr %s107, 36
        %s109 = smul.addr %s108, 4
        %s110 = scalar_lea.vmem %s0, %s109
      $region24: #{unet_forward.10} parent=19 // pred_fallthru
        _
    $region20: #{unet_forward.10} parent=5 // pred_fallthru
      _
    %p111 = scmp.le.s32.totalorder 1, %s8
    %p112 = scmp.lt.s32.totalorder %s8, 3
    %p113 = pnand %p111, %p112
    %p114 = pneg %p113
    // Predicated region
    $region25: #{unet_forward.10} parent=5 // pred_check
      _
    $region26: #{unet_forward.10} parent=5 // pred_check_branch
      %116 = sbr.rel (%p113) target = $region28
    $region27: #{unet_forward.10} parent=5 // pred_region
      %s117 = ssub.s32 %s8, 1
      %p118 = scmp.lt.s32.totalorder %s13, 1
      %s119 = scalar_select %p118, %s13, 1
      %s120 = smul.addr %s119, 36
      %s121 = smul.addr %s120, 4
      %s122 = scalar_lea.vmem %s0, %s121
      %p123 = pneg %p34
      %p124 = pneg %p31
      %p125 = pneg %p55
      %p126 = pneg %p52
      %p127 = pneg %p81
      %p128 = pneg %p78
      %p129 = scmp.lt.s32.totalorder %s13, 1
      %s130 = scalar_select %p129, %s13, 1
      %s131 = smul.addr %s130, 2
      %s132 = smul.addr %s131, 8
      %s133 = scalar_lea.vmem %s2, %s132
      %p134 = scmp.lt.s32.totalorder %s13, 1
      %s135 = scalar_select %p134, %s13, 1
      %s136 = smul.addr %s135, 36
      %s137 = smul.addr %s136, 4
      %s138 = scalar_lea.vmem %s0, %s137
      %p139 = scmp.lt.s32.totalorder %s13, 1
      %s140 = scalar_select %p139, %s13, 1
      %s141 = smul.addr %s140, 2
      %s142 = smul.addr %s141, 8
      %s143 = scalar_lea.vmem %s2, %s142
      %v145 = vld [vmem:[%s1] sm:$0xff]
      %v146 = vld [vmem:[%s138] sm:$0xff]
      %v147 = vld [vmem:[%s138 + $0x8] sm:$0xff]
      %v148 = vld [vmem:[%s138 + $0x10] sm:$0xff]
      %v149 = vld [vmem:[%s138 + $0x18] sm:$0xff]
      %v150 = vld [vmem:[%s138 + $0x20] sm:$0xff]
      %v151 = vld [vmem:[%s138 + $0x28] sm:$0xff]
      %v152 = vld [vmem:[%s138 + $0x30] sm:$0xff]
      %v153 = vld [vmem:[%s138 + $0x38] sm:$0xff]
      %v154 = vld [vmem:[%s138 + $0x40] sm:$0xff]
      %v155 = vld [vmem:[%s138 + $0x48] sm:$0xff]
      %v156 = vld [vmem:[%s138 + $0x50] sm:$0xff]
      %v157 = vld [vmem:[%s138 + $0x58] sm:$0xff]
      %v158 = vld [vmem:[%s138 + $0x60] sm:$0xff]
      %v159 = vld [vmem:[%s138 + $0x68] sm:$0xff]
      %v160 = vld [vmem:[%s138 + $0x70] sm:$0xff]
      %v161 = vld [vmem:[%s138 + $0x78] sm:$0xff]
      %v162 = vld [vmem:[%s138 + $0x80] sm:$0xff]
      %v163 = vld [vmem:[%s138 + $0x88] sm:$0xff]
      %v165 = vunpack.c.l.b16 %v145
      %v166 = vunpack.c.h.b16 %v145
      %v167 = vpack.c.b16 %v165, %v165
      %v168 = vpack.c.b16 %v166, %v166
      %v188 = vunpack.c.l.b16 %v146
      %v189 = vunpack.c.h.b16 %v146
      %v190 = vunpack.c.l.b16 %v147
      %v191 = vunpack.c.h.b16 %v147
      %v192 = vunpack.c.l.b16 %v148
      %v193 = vunpack.c.h.b16 %v148
      %v194 = vunpack.c.l.b16 %v149
      %v195 = vunpack.c.h.b16 %v149
      %v196 = vunpack.c.l.b16 %v150
      %v197 = vunpack.c.h.b16 %v150
      %v198 = vunpack.c.l.b16 %v151
      %v199 = vunpack.c.h.b16 %v151
      %v200 = vunpack.c.l.b16 %v152
      %v201 = vunpack.c.h.b16 %v152
      %v202 = vunpack.c.l.b16 %v153
      %v203 = vunpack.c.h.b16 %v153
      %v204 = vunpack.c.l.b16 %v154
      %v205 = vunpack.c.h.b16 %v154
      %v206 = vunpack.c.l.b16 %v155
      %v207 = vunpack.c.h.b16 %v155
      %v208 = vunpack.c.l.b16 %v156
      %v209 = vunpack.c.h.b16 %v156
      %v210 = vunpack.c.l.b16 %v157
      %v211 = vunpack.c.h.b16 %v157
      %v212 = vunpack.c.l.b16 %v158
      %v213 = vunpack.c.h.b16 %v158
      %v214 = vunpack.c.l.b16 %v159
      %v215 = vunpack.c.h.b16 %v159
      %v216 = vunpack.c.l.b16 %v160
      %v217 = vunpack.c.h.b16 %v160
      %v218 = vunpack.c.l.b16 %v161
      %v219 = vunpack.c.h.b16 %v161
      %v220 = vunpack.c.l.b16 %v162
      %v221 = vunpack.c.h.b16 %v162
      %v222 = vunpack.c.l.b16 %v163
      %v223 = vunpack.c.h.b16 %v163
      %v224 = vpack.c.b16 %v190, %v188
      %v225 = vpack.c.b16 %v191, %v189
      %v226 = vpack.c.b16 %v194, %v192
      %v227 = vpack.c.b16 %v195, %v193
      %v228 = vpack.c.b16 %v198, %v196
      %v229 = vpack.c.b16 %v199, %v197
      %v230 = vpack.c.b16 %v202, %v200
      %v231 = vpack.c.b16 %v203, %v201
      %v232 = vpack.c.b16 %v206, %v204
      %v233 = vpack.c.b16 %v207, %v205
      %v234 = vpack.c.b16 %v210, %v208
      %v235 = vpack.c.b16 %v211, %v209
      %v236 = vpack.c.b16 %v214, %v212
      %v237 = vpack.c.b16 %v215, %v213
      %v238 = vpack.c.b16 %v218, %v216
      %v239 = vpack.c.b16 %v219, %v217
      %v240 = vpack.c.b16 %v222, %v220
      %v241 = vpack.c.b16 %v223, %v221
      %vm260 = vcmask 130048
      %v262 = vsel %vm260, %v168, 0
      %264 = vmatprep.subr.bf16.mxu0 %v239
      %265 = vmatpush1.bf16.msra.mxu0 %v238
      %266 = vmatprep.subr.bf16.mxu0 %v237
      %267 = vmatpush1.bf16.msra.mxu0 %v236
      %268 = vmatprep.subr.bf16.mxu0 %v235
      %269 = vmatpush1.bf16.msra.mxu0 %v234
      %270 = vmatprep.subr.bf16.mxu0 %v233
      %271 = vmatpush1.bf16.msra.mxu0 %v232
      %272 = vmatprep.subr.bf16.mxu0 %v231
      %273 = vmatpush1.bf16.msra.mxu0 %v230
      %274 = vmatprep.subr.bf16.mxu0 %v229
      %275 = vmatpush1.bf16.msra.mxu0 %v228
      %276 = vmatprep.subr.bf16.mxu0 %v227
      %277 = vmatpush1.bf16.msra.mxu0 %v226
      %278 = vmatprep.subr.bf16.mxu0 %v225
      %279 = vmatpush1.bf16.msra.mxu0 %v224
      %280 = vmatprep.subr.bf16.mxu0 0
      %281 = vmatpush2.bf16.msra.mxu0 0
      %282 = vmatprep.subr.bf16.mxu0 0
      %283 = vmatpush2.bf16.msra.mxu0 0
      %284 = vmatprep.subr.bf16.mxu0 0
      %285 = vmatpush2.bf16.msra.mxu0 0
      %286 = vmatprep.subr.bf16.mxu0 0
      %287 = vmatpush2.bf16.msra.mxu0 0
      %288 = vmatprep.subr.bf16.mxu0 0
      %289 = vmatpush2.bf16.msra.mxu0 0
      %290 = vmatprep.subr.bf16.mxu0 0
      %291 = vmatpush2.bf16.msra.mxu0 0
      %292 = vmatprep.subr.bf16.mxu0 0
      %293 = vmatpush2.bf16.msra.mxu0 0
      %294 = vmatprep.subr.bf16.mxu0 %v241
      %295 = vmatpush2.bf16.msra.mxu0 %v240
      %296 = vmatprep.mubr.bf16.mxu0 %v262
      %297 = vmatmul.mubr.bf16.gmra.mxu0 %v167
      %v298 = vpop.f32.mrf.mxu0
      %v299 = vadd.f32 0.0, %v298
      %v300 = vpop.f32.mrf.mxu0
      %v301 = vadd.f32 0.0, %v300
      %v302 = vpop.f32.mrf.mxu0
      %v303 = vpop.f32.mrf.mxu0
      %304 = vdwg.mxu0
      %v305 = vadd.f32 %v299, %v301
      %306 = vadd.xlane.f32.xlu0 %v305
      %v307 = vpop.xlane.xlu0 %306
      %v308 = vrcp.pop 256.0
      %v309 = vmul.f32 %v307, %v308
      %v310 = vmul.f32 %v299, %v299
      %v311 = vmul.f32 %v301, %v301
      %v312 = vadd.f32 %v310, %v311
      %313 = vadd.xlane.f32.xlu0 %v312
      %v314 = vpop.xlane.xlu0 %313
      %v315 = vmul.f32 %v314, %v308
      %v316 = vmul.f32 %v309, %v309
      %v317 = vsub.f32 %v315, %v316
      %v318 = vsub.f32 %v299, %v309
      %v319 = vsub.f32 %v301, %v309
      %v320 = vadd.f32 %v317, 1e-05
      %v321 = vrsqrt.pop %v320
      %v322 = vmul.f32 %v318, %v321
      %v323 = vmul.f32 %v319, %v321
      %v324 = vmax.f32 %v322, 0.0
      %v325 = vmax.f32 %v323, 0.0
      %326 = vst [vmem:[%s143] sm:$0xff] %v324
      %327 = vst [vmem:[%s143 + $0x8] sm:$0xff] %v325
      %p328 = scmp.lt.s32.totalorder %s13, 1
      %s329 = scalar_select %p328, %s13, 1
      %s330 = smul.addr %s329, 2
      %s331 = smul.addr %s330, 8
      %s332 = scalar_lea.vmem %s2, %s331
      // Predicated region
      $region29: #{unet_forward.10} parent=27 // pred_check
        %p333 = pneg %p78
      $region30: #{unet_forward.10} parent=27 // pred_check_branch
        %335 = sbr.rel (%p333) target = $region32
      $region31: #{unet_forward.10} parent=27 // pred_region
        _
      $region32: #{unet_forward.10} parent=27 // pred_fallthru
        _
    $region28: #{unet_forward.10} parent=5 // pred_fallthru
      _
    %p336 = scmp.le.s32.totalorder 2, %s8
    // Predicated region
    $region33: #{unet_forward.10} parent=5 // pred_check
      %p337 = pneg %p336
    $region34: #{unet_forward.10} parent=5 // pred_check_branch
      %339 = sbr.rel (%p337) target = $region36
    $region35: #{unet_forward.10} parent=5 // pred_region
      %s340 = ssub.s32 %s8, 2
      // Predicated region
      $region37: #{unet_forward.10} parent=35 // pred_check
        %p341 = pneg %p84
      $region38: #{unet_forward.10} parent=35 // pred_check_branch
        %343 = sbr.rel (%p341) target = $region40
      $region39: #{unet_forward.10} parent=35 // pred_region
        %p344 = scmp.lt.s32.totalorder %s14, 1
        %s345 = scalar_select %p344, %s14, 1
        %s346 = smul.addr %s345, 2
        %s347 = smul.addr %s346, 8
        %s348 = scalar_lea.vmem %s2, %s347
      $region40: #{unet_forward.10} parent=35 // pred_fallthru
        _
    $region36: #{unet_forward.10} parent=5 // pred_fallthru
      _
  $region6: #{unet_forward.10} parent=0 // loop_footer
    %s12 = sadd.s32 1, %s8
  $region7: #{unet_forward.10} parent=0 // loop_footer_branch
    %7 = sbr.rel target = $region3
  $region8: #{unet_forward.10} parent=0 // loop_exit
    _

// kernel: unet_forward.11
$region0: #{unet_forward.11}
  #allocation0 [shape = 'u32[]', space=smem, size = 0x4, offset = 0x4, fixed_abs, tag = 'smem constant byte address 0x4 - core index']
  #allocation1 [shape = 'u32[144,128]{1,0:T(1,128)}', space=vmem, size = 0x12000, scoped, tag = 'internal scratch']
  %s0 = inlined_call_operand.vmem [shape: f32[2,8,256], index: 0, kind: input, shape index: {}]
  %s1 = inlined_call_operand.vmem [shape: f32[2,8], index: 1, kind: input, shape index: {}]
  %s2 = inlined_call_operand.vmem [shape: f32[2,1], index: 2, kind: input, shape index: {}]
  %s3 = inlined_call_operand.vmem [shape: f32[2,2,256], index: 3, kind: input, shape index: {}]
  %s4 = inlined_call_operand.vmem [shape: f32[2,2,256], index: 4, kind: output, shape index: {}]
  %s5 = sld [smem:[#allocation0]]
  $region49: #{unet_forward.11} parent=0
    _
  %s7 = ssub.s32 1, %s5
  %s8 = scalar_select 0, %s7, %s5
  loop: start=0, step=1, limit=4
  $region2: #{unet_forward.11} parent=0 // loop_pre_header
    _
  $region3: #{unet_forward.11} parent=0 // loop_header
    %s10 = sphi 0, %s14
    %p11 = scmp.ge.s32.totalorder %s10, 4
    %s20 = sphi 0, %s22
    %s23 = sphi 0, %s20
    %s24 = sphi 0, %s23
    %s40 = sphi 0, %s24
    %s44 = sphi 0, %s44
    %s46 = sphi 0, %s44
    %s47 = sphi 0, %s46
    %s61 = sphi 0, %s47
    %s65 = sphi 0, %s65
    %s67 = sphi 0, %s65
    %s68 = sphi 0, %s67
    %s82 = sphi 0, %s68
    %s88 = sphi 0, %s90
    %s91 = sphi 0, %s88
    %s92 = sphi 0, %s91
    %s108 = sphi 0, %s92
    %s114 = sphi 0, %s116
    %s117 = sphi 0, %s114
    %s118 = sphi 0, %s117
    %s134 = sphi 0, %s118
  $region4: #{unet_forward.11} parent=0 // loop_header_branch
    %13 = sbr.rel (%p11) target = $region8
  $region5: #{unet_forward.11} parent=0 // loop_body
    %s15 = ssub.s32 %s10, 1
    %s16 = ssub.s32 %s10, 2
    %s17 = sadd.s32 %s10, 1
    %s18 = ssub.s32 %s10, %s17
    %p19 = scmp.eq.s32.totalorder %s18, 0
    %s21 = sadd.s32 %s20, 1
    %s22 = scalar_select %p19, %s20, %s21
    %p25 = pneg %p19
    %p26 = scmp.eq.s32.totalorder %s10, 1
    %p27 = por %p25, %p26
    %p28 = scmp.ne.s32.totalorder %s20, %s23
    %p29 = scmp.eq.s32.totalorder %s10, 0
    %p30 = por %p28, %p29
    %p31 = scmp.ne.s32.totalorder %s20, %s23
    %p32 = scmp.eq.s32.totalorder %s15, 1
    %p33 = por %p31, %p32
    %p34 = scmp.ne.s32.totalorder %s23, %s24
    %p35 = scmp.eq.s32.totalorder %s15, 0
    %p36 = por %p34, %p35
    %p37 = scmp.ne.s32.totalorder %s23, %s24
    %p38 = scmp.eq.s32.totalorder %s16, 1
    %p39 = por %p37, %p38
    %p41 = scmp.ne.s32.totalorder %s24, %s40
    %p42 = scmp.eq.s32.totalorder %s16, 0
    %p43 = por %p41, %p42
    %s45 = sadd.s32 %s44, 1
    %p48 = scmp.eq.s32.totalorder %s10, 1
    %p49 = scmp.ne.s32.totalorder %s44, %s46
    %p50 = scmp.eq.s32.totalorder %s10, 0
    %p51 = por %p49, %p50
    %p52 = scmp.ne.s32.totalorder %s44, %s46
    %p53 = scmp.eq.s32.totalorder %s15, 1
    %p54 = por %p52, %p53
    %p55 = scmp.ne.s32.totalorder %s46, %s47
    %p56 = scmp.eq.s32.totalorder %s15, 0
    %p57 = por %p55, %p56
    %p58 = scmp.ne.s32.totalorder %s46, %s47
    %p59 = scmp.eq.s32.totalorder %s16, 1
    %p60 = por %p58, %p59
    %p62 = scmp.ne.s32.totalorder %s47, %s61
    %p63 = scmp.eq.s32.totalorder %s16, 0
    %p64 = por %p62, %p63
    %s66 = sadd.s32 %s65, 1
    %p69 = scmp.eq.s32.totalorder %s10, 1
    %p70 = scmp.ne.s32.totalorder %s65, %s67
    %p71 = scmp.eq.s32.totalorder %s10, 0
    %p72 = por %p70, %p71
    %p73 = scmp.ne.s32.totalorder %s65, %s67
    %p74 = scmp.eq.s32.totalorder %s15, 1
    %p75 = por %p73, %p74
    %p76 = scmp.ne.s32.totalorder %s67, %s68
    %p77 = scmp.eq.s32.totalorder %s15, 0
    %p78 = por %p76, %p77
    %p79 = scmp.ne.s32.totalorder %s67, %s68
    %p80 = scmp.eq.s32.totalorder %s16, 1
    %p81 = por %p79, %p80
    %p83 = scmp.ne.s32.totalorder %s68, %s82
    %p84 = scmp.eq.s32.totalorder %s16, 0
    %p85 = por %p83, %p84
    %s86 = ssub.s32 %s10, %s17
    %p87 = scmp.eq.s32.totalorder %s86, 0
    %s89 = sadd.s32 %s88, 1
    %s90 = scalar_select %p87, %s88, %s89
    %p93 = pneg %p87
    %p94 = scmp.eq.s32.totalorder %s10, 1
    %p95 = por %p93, %p94
    %p96 = scmp.ne.s32.totalorder %s88, %s91
    %p97 = scmp.eq.s32.totalorder %s10, 0
    %p98 = por %p96, %p97
    %p99 = scmp.ne.s32.totalorder %s88, %s91
    %p100 = scmp.eq.s32.totalorder %s15, 1
    %p101 = por %p99, %p100
    %p102 = scmp.ne.s32.totalorder %s91, %s92
    %p103 = scmp.eq.s32.totalorder %s15, 0
    %p104 = por %p102, %p103
    %p105 = scmp.ne.s32.totalorder %s91, %s92
    %p106 = scmp.eq.s32.totalorder %s16, 1
    %p107 = por %p105, %p106
    %p109 = scmp.ne.s32.totalorder %s92, %s108
    %p110 = scmp.eq.s32.totalorder %s16, 0
    %p111 = por %p109, %p110
    %s112 = ssub.s32 %s10, %s17
    %p113 = scmp.eq.s32.totalorder %s112, 0
    %s115 = sadd.s32 %s114, 1
    %s116 = scalar_select %p113, %s114, %s115
    %p119 = pneg %p113
    %p120 = scmp.eq.s32.totalorder %s10, 1
    %p121 = por %p119, %p120
    %p122 = scmp.ne.s32.totalorder %s114, %s117
    %p123 = scmp.eq.s32.totalorder %s10, 0
    %p124 = por %p122, %p123
    %p125 = scmp.ne.s32.totalorder %s114, %s117
    %p126 = scmp.eq.s32.totalorder %s15, 1
    %p127 = por %p125, %p126
    %p128 = scmp.ne.s32.totalorder %s117, %s118
    %p129 = scmp.eq.s32.totalorder %s15, 0
    %p130 = por %p128, %p129
    %p131 = scmp.ne.s32.totalorder %s117, %s118
    %p132 = scmp.eq.s32.totalorder %s16, 1
    %p133 = por %p131, %p132
    %p135 = scmp.ne.s32.totalorder %s118, %s134
    %p136 = scmp.eq.s32.totalorder %s16, 0
    %p137 = por %p135, %p136
    %p138 = scmp.le.s32.totalorder 1, %s10
    %p139 = scmp.lt.s32.totalorder %s10, 3
    %p140 = pnand %p138, %p139
    %p141 = pneg %p140
    // Predicated region
    $region9: #{unet_forward.11} parent=5 // pred_check
      _
    $region10: #{unet_forward.11} parent=5 // pred_check_branch
      %143 = sbr.rel (%p140) target = $region12
    $region11: #{unet_forward.11} parent=5 // pred_region
      %s144 = ssub.s32 %s10, 1
      // Predicated region
      $region13: #{unet_forward.11} parent=11 // pred_check
        %p145 = pneg %p57
      $region14: #{unet_forward.11} parent=11 // pred_check_branch
        %147 = sbr.rel (%p145) target = $region16
      $region15: #{unet_forward.11} parent=11 // pred_region
        _
      $region16: #{unet_forward.11} parent=11 // pred_fallthru
        _
      // Predicated region
      $region17: #{unet_forward.11} parent=11 // pred_check
        %p148 = pneg %p78
      $region18: #{unet_forward.11} parent=11 // pred_check_branch
        %150 = sbr.rel (%p148) target = $region20
      $region19: #{unet_forward.11} parent=11 // pred_region
        _
      $region20: #{unet_forward.11} parent=11 // pred_fallthru
        _
    $region12: #{unet_forward.11} parent=5 // pred_fallthru
      _
    %p151 = scmp.lt.s32.totalorder %s10, 2
    // Predicated region
    $region21: #{unet_forward.11} parent=5 // pred_check
      %p152 = pneg %p151
    $region22: #{unet_forward.11} parent=5 // pred_check_branch
      %154 = sbr.rel (%p152) target = $region24
    $region23: #{unet_forward.11} parent=5 // pred_region
      // Predicated region
      $region25: #{unet_forward.11} parent=23 // pred_check
        %p155 = pneg %p30
      $region26: #{unet_forward.11} parent=23 // pred_check_branch
        %157 = sbr.rel (%p155) target = $region28
      $region27: #{unet_forward.11} parent=23 // pred_region
        %p158 = scmp.lt.s32.totalorder %s10, 1
        %s159 = scalar_select %p158, %s10, 1
        %s160 = smul.addr %s159, 2
        %s161 = smul.addr %s160, 8
        %s162 = scalar_lea.vmem %s0, %s161
      $region28: #{unet_forward.11} parent=23 // pred_fallthru
        _
      // Predicated region
      $region29: #{unet_forward.11} parent=23 // pred_check
        %p163 = pneg %p98
      $region30: #{unet_forward.11} parent=23 // pred_check_branch
        %165 = sbr.rel (%p163) target = $region32
      $region31: #{unet_forward.11} parent=23 // pred_region
        %p166 = scmp.lt.s32.totalorder %s10, 1
        %s167 = scalar_select %p166, %s10, 1
        %s168 = smul.addr %s167, 2
        %s169 = smul.addr %s168, 2
        %s170 = scalar_lea.vmem %s3, %s169
      $region32: #{unet_forward.11} parent=23 // pred_fallthru
        _
    $region24: #{unet_forward.11} parent=5 // pred_fallthru
      _
    %p171 = scmp.le.s32.totalorder 1, %s10
    %p172 = scmp.lt.s32.totalorder %s10, 3
    %p173 = pnand %p171, %p172
    %p174 = pneg %p173
    // Predicated region
    $region33: #{unet_forward.11} parent=5 // pred_check
      _
    $region34: #{unet_forward.11} parent=5 // pred_check_branch
      %176 = sbr.rel (%p173) target = $region36
    $region35: #{unet_forward.11} parent=5 // pred_region
      %s177 = ssub.s32 %s10, 1
      %p178 = scmp.lt.s32.totalorder %s15, 1
      %s179 = scalar_select %p178, %s15, 1
      %s180 = smul.addr %s179, 2
      %s181 = smul.addr %s180, 8
      %s182 = scalar_lea.vmem %s0, %s181
      %p183 = pneg %p36
      %p184 = pneg %p33
      %p185 = pneg %p57
      %p186 = pneg %p54
      %p187 = pneg %p78
      %p188 = pneg %p75
      %p189 = scmp.lt.s32.totalorder %s15, 1
      %s190 = scalar_select %p189, %s15, 1
      %s191 = smul.addr %s190, 2
      %s192 = smul.addr %s191, 2
      %s193 = scalar_lea.vmem %s3, %s192
      %p194 = pneg %p104
      %p195 = pneg %p101
      %p196 = pneg %p130
      %p197 = pneg %p127
      %p198 = scmp.lt.s32.totalorder %s15, 1
      %s199 = scalar_select %p198, %s15, 1
      %s200 = smul.addr %s199, 2
      %s201 = smul.addr %s200, 2
      %s202 = scalar_lea.vmem %s4, %s201
      %p203 = scmp.lt.s32.totalorder %s15, 1
      %s204 = scalar_select %p203, %s15, 1
      %s205 = smul.addr %s204, 2
      %s206 = smul.addr %s205, 8
      %s207 = scalar_lea.vmem %s0, %s206
      %p208 = scmp.lt.s32.totalorder %s15, 1
      %s209 = scalar_select %p208, %s15, 1
      %s210 = smul.addr %s209, 2
      %s211 = smul.addr %s210, 2
      %s212 = scalar_lea.vmem %s3, %s211
      %p213 = scmp.lt.s32.totalorder %s15, 1
      %s214 = scalar_select %p213, %s15, 1
      %s215 = smul.addr %s214, 2
      %s216 = smul.addr %s215, 2
      %s217 = scalar_lea.vmem %s4, %s216
      %v218 = vld [vmem:[%s1] sm:$0x3]
      %v219 = vld [vmem:[%s207] sm:$0xff]
      %v220 = vld [vmem:[%s207 + $0x8] sm:$0xff]
      %v221 = vld [vmem:[%s2] sm:$0x3]
      %223 = vset.pattern.permute.xlu0 0
      %224 = vperm.xlu0 %223, %v221
      %v225 = vpop.permute.xlu0 %224
      %vm227 = vcmask 64512
      %v229 = vsel %vm227, %v218, 0
      %231 = vmatprep.subr.mxu0 0.0
      %232 = vmatpush1.msra.mxu0 0.0
      %233 = vmatprep.subr.mxu0 0.0
      %234 = vmatpush1.msra.mxu0 0.0
      %235 = vmatprep.subr.mxu0 0.0
      %236 = vmatpush1.msra.mxu0 0.0
      %237 = vmatprep.subr.mxu0 0.0
      %238 = vmatpush1.msra.mxu0 0.0
      %239 = vmatprep.subr.mxu0 0.0
      %240 = vmatpush1.msra.mxu0 0.0
      %241 = vmatprep.subr.mxu0 0.0
      %242 = vmatpush1.msra.mxu0 0.0
      %243 = vmatprep.subr.mxu0 0.0
      %244 = vmatpush1.msra.mxu0 0.0
      %245 = vmatprep.subr.mxu0 0.0
      %246 = vmatpush1.msra.mxu0 0.0
      %247 = vmatprep.subr.mxu0 0.0
      %248 = vmatpush1.msra.mxu0 0.0
      %249 = vmatprep.subr.mxu0 0.0
      %250 = vmatpush1.msra.mxu0 0.0
      %251 = vmatprep.subr.mxu0 0.0
      %252 = vmatpush1.msra.mxu0 0.0
      %253 = vmatprep.subr.mxu0 0.0
      %254 = vmatpush1.msra.mxu0 0.0
      %255 = vmatprep.subr.mxu0 0.0
      %256 = vmatpush1.msra.mxu0 0.0
      %257 = vmatprep.subr.mxu0 0.0
      %258 = vmatpush1.msra.mxu0 0.0
      %259 = vmatprep.subr.mxu0 0.0
      %260 = vmatpush1.msra.mxu0 0.0
      %261 = vmatprep.subr.mxu0 %v220
      %262 = vmatpush1.msra.mxu0 %v219
      %263 = vmatprep.subr.mxu0 0.0
      %264 = vmatpush2.msra.mxu0 0.0
      %265 = vmatprep.subr.mxu0 0.0
      %266 = vmatpush2.msra.mxu0 0.0
      %267 = vmatprep.subr.mxu0 0.0
      %268 = vmatpush2.msra.mxu0 0.0
      %269 = vmatprep.subr.mxu0 0.0
      %270 = vmatpush2.msra.mxu0 0.0
      %271 = vmatprep.subr.mxu0 0.0
      %272 = vmatpush2.msra.mxu0 0.0
      %273 = vmatprep.subr.mxu0 0.0
      %274 = vmatpush2.msra.mxu0 0.0
      %275 = vmatprep.subr.mxu0 0.0
      %276 = vmatpush2.msra.mxu0 0.0
      %277 = vmatprep.subr.mxu0 0.0
      %278 = vmatpush2.msra.mxu0 0.0
      %279 = vmatprep.subr.mxu0 0.0
      %280 = vmatpush2.msra.mxu0 0.0
      %281 = vmatprep.subr.mxu0 0.0
      %282 = vmatpush2.msra.mxu0 0.0
      %283 = vmatprep.subr.mxu0 0.0
      %284 = vmatpush2.msra.mxu0 0.0
      %285 = vmatprep.subr.mxu0 0.0
      %286 = vmatpush2.msra.mxu0 0.0
      %287 = vmatprep.subr.mxu0 0.0
      %288 = vmatpush2.msra.mxu0 0.0
      %289 = vmatprep.subr.mxu0 0.0
      %290 = vmatpush2.msra.mxu0 0.0
      %291 = vmatprep.subr.mxu0 0.0
      %292 = vmatpush2.msra.mxu0 0.0
      %293 = vmatprep.subr.mxu0 0.0
      %294 = vmatpush2.msra.mxu0 0.0
      %295 = vmatprep.mubr.f32.mxu0 0.0
      %296 = vmatmul.mubr.f32.gmra.mxu0 %v229
      %v297 = vpop.f32.mrf.mxu0
      %v298 = vadd.f32 %v225, %v297
      %v299 = vpop.f32.mrf.mxu0
      %v300 = vadd.f32 %v225, %v299
      %301 = vdwg.mxu0
      %v302 = vld [vmem:[%s212] sm:$0xf]
      %v305 = vunpack.c.l.s4 1983009808
      %v306 = vunpack.c.0.s8 %v305
      %v307 = vlaneseq
      %v308 = vshrl.u32 %v307, 7
      %v309 = vsub.s32 %v306, %v308
      %v310 = vrot.slane %v302, %v309
      %v311 = vcombine.high %v310, %v310
      %v314 = vadd.f32 %v298, %v310
      %v315 = vadd.f32 %v300, %v311
      %v318 = vcombine.low %v314, %v315
      %v320 = vunpack.c.l.s4 1983009808
      %v321 = vunpack.c.0.s8 %v320
      %v322 = vlaneseq
      %v323 = vshrl.u32 %v322, 7
      %v324 = vsub.s32 %v321, %v323
      %v325 = vrot.slane %v318, %v324
      %327 = vst [vmem:[%s217] sm:$0xf] %v325
      %p328 = scmp.lt.s32.totalorder %s15, 1
      %s329 = scalar_select %p328, %s15, 1
      %s330 = smul.addr %s329, 2
      %s331 = smul.addr %s330, 2
      %s332 = scalar_lea.vmem %s4, %s331
      // Predicated region
      $region37: #{unet_forward.11} parent=35 // pred_check
        %p333 = pneg %p127
      $region38: #{unet_forward.11} parent=35 // pred_check_branch
        %335 = sbr.rel (%p333) target = $region40
      $region39: #{unet_forward.11} parent=35 // pred_region
        _
      $region40: #{unet_forward.11} parent=35 // pred_fallthru
        _
    $region36: #{unet_forward.11} parent=5 // pred_fallthru
      _
    %p336 = scmp.le.s32.totalorder 2, %s10
    // Predicated region
    $region41: #{unet_forward.11} parent=5 // pred_check
      %p337 = pneg %p336
    $region42: #{unet_forward.11} parent=5 // pred_check_branch
      %339 = sbr.rel (%p337) target = $region44
    $region43: #{unet_forward.11} parent=5 // pred_region
      %s340 = ssub.s32 %s10, 2
      // Predicated region
      $region45: #{unet_forward.11} parent=43 // pred_check
        %p341 = pneg %p133
      $region46: #{unet_forward.11} parent=43 // pred_check_branch
        %343 = sbr.rel (%p341) target = $region48
      $region47: #{unet_forward.11} parent=43 // pred_region
        %p344 = scmp.lt.s32.totalorder %s16, 1
        %s345 = scalar_select %p344, %s16, 1
        %s346 = smul.addr %s345, 2
        %s347 = smul.addr %s346, 2
        %s348 = scalar_lea.vmem %s4, %s347
      $region48: #{unet_forward.11} parent=43 // pred_fallthru
        _
    $region44: #{unet_forward.11} parent=5 // pred_fallthru
      _
  $region6: #{unet_forward.11} parent=0 // loop_footer
    %s14 = sadd.s32 1, %s10
  $region7: #{unet_forward.11} parent=0 // loop_footer_branch
    %9 = sbr.rel target = $region3
  $region8: #{unet_forward.11} parent=0 // loop_exit
    _

// kernel: custom-call
$region0: #{custom-call}
  %s0 = inlined_call_operand.hbm [shape: c64[2,2,16,16], index: 0, kind: input, shape index: {}]
  %s1 = inlined_call_operand.vmem [shape: f32[2,2,16,16], index: 1, kind: output, shape index: {}]
  $region1: #{custom-call} parent=0
    #allocation0 [shape = 's32[1]{0}', space=sflag, size = 0x4, scoped, tag = 'scoped memory for custom-call']
    %2 = vsyncpa [#allocation0], 0
    %s3 = sshll.u32 %s1, 4
    %s4 = int_to_ptr.vmem [resolvable:$true] %s3
    %6 = dma.hbm_to_vmem [thread:$0]  %s0, 1024, %s4, [#allocation0]
    %7 = dma.done [#allocation0], 1024
    %8 = vsyncpa [#allocation0], 1

// kernel: custom-call.1
$region0: #{custom-call.1}
  %s0 = inlined_call_operand.hbm [shape: c64[2,2,16,16], index: 0, kind: input, shape index: {}]
  %s1 = inlined_call_operand.vmem [shape: f32[2,2,16,16], index: 1, kind: output, shape index: {}]
  %s2 = scalar_lea.hbm %s0, 1024
  $region1: #{custom-call.1} parent=0
    #allocation0 [shape = 's32[1]{0}', space=sflag, size = 0x4, scoped, tag = 'scoped memory for custom-call.1']
    %3 = vsyncpa [#allocation0], 0
    %s4 = sshll.u32 %s1, 4
    %s5 = int_to_ptr.vmem [resolvable:$true] %s4
    %7 = dma.hbm_to_vmem [thread:$0]  %s2, 1024, %s5, [#allocation0]
    %8 = dma.done [#allocation0], 1024
    %9 = vsyncpa [#allocation0], 1

</llo_original>
